<compile_context>
chip_gen: v5e
topology: v5e:2x2
jax: 0.10.0
libtpu: 0.0.40
codegen_flags: <defaults>
</compile_context>

<pallas_src>
import math
import functools

import jax
import jax.numpy as jnp
from jax.experimental import pallas as pl
from jax.experimental.pallas import tpu as pltpu


def _layernorm(x, gamma, beta, eps=1e-6):
    mean = jnp.mean(x, axis=-1, keepdims=True)
    var = jnp.mean((x - mean) ** 2, axis=-1, keepdims=True)
    return (x - mean) * jax.lax.rsqrt(var + eps) * gamma + beta


def encoder_stack_kernel(num_head,
                         x_in_ref,
                         wq_ref, bq_ref, wk_ref, bk_ref, wv_ref, bv_ref,
                         wo_ref, bo_ref, w1_ref, b1_ref, w2_ref, b2_ref,
                         gamma_ref, beta_ref,
                         prob_ref, out_ref,
                         x_vmem):
    """One grid step == one encoder layer; activation is resident in x_vmem."""
    layer = pl.program_id(0)

    # Layer 0 seeds the resident activation from the embedded input.
    @pl.when(layer == 0)
    def _():
        x_vmem[...] = x_in_ref[...]

    x3 = x_vmem[...]                          # (B, S, E) f32
    B, S, E = x3.shape
    H = num_head
    dk = E // H

    x2 = x3.reshape(B * S, E)                 # leading-dim merge (tile aligned)
    xb = x2.astype(jnp.bfloat16)              # bf16 feed for the MXU

    scale = 1.0 / math.sqrt(E)                # module divides by sqrt(emb_dim), not sqrt(d_k)
    gamma = gamma_ref[0, 0]
    beta = beta_ref[0, 0]

    probs = []
    attn = jnp.zeros((B * S, E), jnp.float32)
    for h in range(H):                        # static unroll; weights pre-split per head
        qh = jnp.dot(xb, wq_ref[0, h], preferred_element_type=jnp.float32) + bq_ref[0, h]
        kh = jnp.dot(xb, wk_ref[0, h], preferred_element_type=jnp.float32) + bk_ref[0, h]
        vh = jnp.dot(xb, wv_ref[0, h], preferred_element_type=jnp.float32) + bv_ref[0, h]
        qh = qh * scale                       # fold 1/sqrt(E) into q (small tensor)

        qb = qh.reshape(B, S, dk).astype(jnp.bfloat16)
        kb = kh.reshape(B, S, dk).astype(jnp.bfloat16)
        vb = vh.reshape(B, S, dk).astype(jnp.bfloat16)

        # batched-over-batch dot_generals (flash-attention pattern), f32 accumulation
        s = jnp.einsum('bqd,bkd->bqk', qb, kb,
                       preferred_element_type=jnp.float32)            # (B, S, S)
        s = s - jnp.max(s, axis=-1, keepdims=True)
        e = jnp.exp(s)
        p = e * pl.reciprocal(jnp.sum(e, axis=-1, keepdims=True), approx=True)
        probs.append(p)

        o = jnp.einsum('bqk,bkd->bqd', p.astype(jnp.bfloat16), vb,
                       preferred_element_type=jnp.float32)            # (B, S, dk)
        # per-head slice of the output projection, accumulated in f32 (no concat)
        attn = attn + jnp.dot(o.reshape(B * S, dk).astype(jnp.bfloat16),
                              wo_ref[0, h], preferred_element_type=jnp.float32)

    attn = attn + bo_ref[0, 0]
    prob_ref[0] = jnp.stack(probs, axis=1)    # (B, H, S, S) — single store per layer

    # residual + LayerNorm (dropout == identity in eval mode), f32 stats
    y = _layernorm(x2 + attn, gamma, beta)

    # position-wise feed forward (bf16 matmuls, f32 accumulation)
    h1 = jnp.dot(y.astype(jnp.bfloat16), w1_ref[0],
                 preferred_element_type=jnp.float32) + b1_ref[0, 0]
    h1 = jnp.maximum(h1, 0.0)
    ff = jnp.dot(h1.astype(jnp.bfloat16), w2_ref[0],
                 preferred_element_type=jnp.float32) + b2_ref[0, 0]

    new_x = _layernorm(y + ff, gamma, beta)   # same gamma/beta (module reuses norm_layer)

    x_vmem[...] = new_x.reshape(B, S, E)      # carry activation to the next layer

    @pl.when(layer == pl.num_programs(0) - 1)
    def _():
        out_ref[...] = new_x.reshape(B, S, E)


def encoder_stack(x, kp, num_head):
    """Run all encoder layers in a single pallas_call.

    x:  (B, S, E) f32 embedded+PE input.
    kp: kernel-layout params, each with leading layer dim L.
    Returns (probs [L, B, H, S, S] f32, out [B, S, E] f32).
    """
    B, S, E = x.shape
    H = num_head
    dk = E // H
    F = 4 * E
    L = kp["w1"].shape[0]

    in_specs = [
        pl.BlockSpec((B, S, E), lambda l: (0, 0, 0)),            # x (read at layer 0)
        pl.BlockSpec((1, H, E, dk), lambda l: (l, 0, 0, 0)),     # wq (per-head split)
        pl.BlockSpec((1, H, dk), lambda l: (l, 0, 0)),           # bq
        pl.BlockSpec((1, H, E, dk), lambda l: (l, 0, 0, 0)),     # wk
        pl.BlockSpec((1, H, dk), lambda l: (l, 0, 0)),           # bk
        pl.BlockSpec((1, H, E, dk), lambda l: (l, 0, 0, 0)),     # wv
        pl.BlockSpec((1, H, dk), lambda l: (l, 0, 0)),           # bv
        pl.BlockSpec((1, H, dk, E), lambda l: (l, 0, 0, 0)),     # wo (per-head split)
        pl.BlockSpec((1, 1, E), lambda l: (l, 0, 0)),            # bo
        pl.BlockSpec((1, E, F), lambda l: (l, 0, 0)),            # w1
        pl.BlockSpec((1, 1, F), lambda l: (l, 0, 0)),            # b1
        pl.BlockSpec((1, F, E), lambda l: (l, 0, 0)),            # w2
        pl.BlockSpec((1, 1, E), lambda l: (l, 0, 0)),            # b2
        pl.BlockSpec((1, 1, E), lambda l: (l, 0, 0)),            # gamma
        pl.BlockSpec((1, 1, E), lambda l: (l, 0, 0)),            # beta
    ]
    out_specs = [
        pl.BlockSpec((1, B, H, S, S), lambda l: (l, 0, 0, 0, 0)),   # per-layer probs
        pl.BlockSpec((B, S, E), lambda l: (0, 0, 0)),               # final output (resident)
    ]
    out_shape = [
        jax.ShapeDtypeStruct((L, B, H, S, S), jnp.float32),
        jax.ShapeDtypeStruct((B, S, E), jnp.float32),
    ]

    kern = functools.partial(encoder_stack_kernel, num_head)
    probs, out = pl.pallas_call(
        kern,
        grid=(L,),
        in_specs=in_specs,
        out_specs=out_specs,
        out_shape=out_shape,
        scratch_shapes=[pltpu.VMEM((B, S, E), jnp.float32)],     # resident activation
        compiler_params=pltpu.CompilerParams(
            # layers are sequential (activation carried across the grid axis)
            dimension_semantics=("arbitrary",),
            # modestly raised scoped-VMEM limit; safe on v5e/v6e/v7x.  For
            # realistic E, tile the 4E FFN dim and raise this further on v6e.
            vmem_limit_bytes=48 * 1024 * 1024,
        ),
    )(x,
      kp["wq"], kp["bq"], kp["wk"], kp["bk"], kp["wv"], kp["bv"],
      kp["wo"], kp["bo"], kp["w1"], kp["b1"], kp["w2"], kp["b2"],
      kp["gamma"], kp["beta"])
    return probs, out


def pack_params(params, num_head):
    """Re-layout stacked params for the kernel: per-head split Q/K/V/out-proj
    weights (no in-kernel lane slicing) and bf16 matmul operands."""
    L, E, _ = params["wq"].shape
    H = num_head
    dk = E // H
    F = 4 * E

    def split_cols(w):   # (L, E, E) -> (L, H, E, dk): head = output-column group
        return w.reshape(L, E, H, dk).transpose(0, 2, 1, 3)

    return dict(
        wq=split_cols(params["wq"]).astype(jnp.bfloat16),
        wk=split_cols(params["wk"]).astype(jnp.bfloat16),
        wv=split_cols(params["wv"]).astype(jnp.bfloat16),
        bq=params["bq"].reshape(L, H, dk),
        bk=params["bk"].reshape(L, H, dk),
        bv=params["bv"].reshape(L, H, dk),
        wo=params["wo"].reshape(L, H, dk, E).astype(jnp.bfloat16),   # head = input-row group
        bo=params["bo"].reshape(L, 1, E),
        w1=params["w1"].astype(jnp.bfloat16),
        b1=params["b1"].reshape(L, 1, F),
        w2=params["w2"].astype(jnp.bfloat16),
        b2=params["b2"].reshape(L, 1, E),
        gamma=params["gamma"].reshape(L, 1, E),
        beta=params["beta"].reshape(L, 1, E),
    )


def positional_encoding(max_len, emb_dim):
    pos = jnp.arange(max_len, dtype=jnp.float32)[:, None]
    div = jnp.exp(jnp.arange(0, emb_dim, 2, dtype=jnp.float32)
                  * (-math.log(10000.0) / emb_dim))
    pe = jnp.zeros((max_len, emb_dim), jnp.float32)
    pe = pe.at[:, 0::2].set(jnp.sin(pos * div))
    pe = pe.at[:, 1::2].set(jnp.cos(pos * div))
    return pe


def init_params(key, vocab_size, enc_N, emb_dim, pad_idx):
    """Linear weights stored as [in_features, out_features] (y = x @ W + b)."""
    E, F = emb_dim, 4 * emb_dim
    ks = jax.random.split(key, 14)
    emb = jax.random.normal(ks[0], (vocab_size, E), jnp.float32) * 0.02
    emb = emb.at[pad_idx].set(0.0)   # padding_idx row is zero

    s_e = 1.0 / math.sqrt(E)
    s_f = 1.0 / math.sqrt(F)
    u = lambda k, shape, s: jax.random.uniform(k, shape, jnp.float32, -s, s)

    params = dict(
        wq=u(ks[1], (enc_N, E, E), s_e), bq=u(ks[2], (enc_N, E), s_e),
        wk=u(ks[3], (enc_N, E, E), s_e), bk=u(ks[4], (enc_N, E), s_e),
        wv=u(ks[5], (enc_N, E, E), s_e), bv=u(ks[6], (enc_N, E), s_e),
        wo=u(ks[7], (enc_N, E, E), s_e), bo=u(ks[8], (enc_N, E), s_e),
        w1=u(ks[9], (enc_N, E, F), s_e), b1=u(ks[10], (enc_N, F), s_e),
        w2=u(ks[11], (enc_N, F, E), s_f), b2=u(ks[12], (enc_N, E), s_f),
        gamma=jnp.ones((enc_N, E), jnp.float32),
        beta=jnp.zeros((enc_N, E), jnp.float32),
    )
    return emb, params


def encoder_forward(tokens, emb_table, pe, params, num_head):
    # Embedding lookup + positional encoding (glue, plain JAX); dropout == identity.
    x = jnp.take(emb_table, tokens, axis=0) + pe[None, :tokens.shape[1], :]
    kp = pack_params(params, num_head)
    probs, out = encoder_stack(x, kp, num_head)      # single fused Pallas call
    return probs, out      # probs[l] corresponds to the module's all_prob[l]


def encoder_forward_ref(tokens, emb_table, pe, params, num_head):
    """Plain-JAX reference mirroring the kernel's bf16 matmul inputs."""
    E = emb_table.shape[1]
    H = num_head
    dk = E // H
    L = params["wq"].shape[0]
    bf = lambda a: a.astype(jnp.bfloat16)

    x = jnp.take(emb_table, tokens, axis=0) + pe[None, :tokens.shape[1], :]
    B, S, _ = x.shape
    scale = 1.0 / math.sqrt(E)
    all_prob = []
    for l in range(L):
        q = jnp.dot(bf(x), bf(params["wq"][l]), preferred_element_type=jnp.float32) + params["bq"][l]
        k = jnp.dot(bf(x), bf(params["wk"][l]), preferred_element_type=jnp.float32) + params["bk"][l]
        v = jnp.dot(bf(x), bf(params["wv"][l]), preferred_element_type=jnp.float32) + params["bv"][l]
        q = (q * scale).reshape(B, S, H, dk).transpose(0, 2, 1, 3)
        k = k.reshape(B, S, H, dk).transpose(0, 2, 1, 3)
        v = v.reshape(B, S, H, dk).transpose(0, 2, 1, 3)
        s = jnp.einsum('bhqd,bhkd->bhqk', bf(q), bf(k), preferred_element_type=jnp.float32)
        p = jax.nn.softmax(s, axis=-1)
        all_prob.append(p)
        o = jnp.einsum('bhqk,bhkd->bhqd', bf(p), bf(v), preferred_element_type=jnp.float32)
        o = o.transpose(0, 2, 1, 3).reshape(B, S, E)
        attn = jnp.dot(bf(o), bf(params["wo"][l]), preferred_element_type=jnp.float32) + params["bo"][l]
        y = _layernorm(x + attn, params["gamma"][l], params["beta"][l])
        h1 = jnp.maximum(jnp.dot(bf(y), bf(params["w1"][l]),
                                 preferred_element_type=jnp.float32) + params["b1"][l], 0.0)
        ff = jnp.dot(bf(h1), bf(params["w2"][l]),
                     preferred_element_type=jnp.float32) + params["b2"][l]
        x = _layernorm(y + ff, params["gamma"][l], params["beta"][l])
    return jnp.stack(all_prob, axis=0), x


if __name__ == "__main__":
    # Small, deterministic config.
    vocab_size = 50
    enc_N = 2
    emb_dim = 32
    num_head = 4
    max_len = 16
    pad_idx = 0
    B, S = 2, 8

    key = jax.random.PRNGKey(0)
    k_params, k_tok = jax.random.split(key)
    emb_table, params = init_params(k_params, vocab_size, enc_N, emb_dim, pad_idx)
    pe = positional_encoding(max_len, emb_dim)

    tokens = jax.random.randint(k_tok, (B, S), minval=1, maxval=vocab_size, dtype=jnp.int32)

    all_prob, out = encoder_forward(tokens, emb_table, pe, params, num_head)
    out = jax.block_until_ready(out)
    all_prob = jax.block_until_ready(all_prob)

    # shape / sanity checks
    assert out.shape == (B, S, emb_dim)
    assert all_prob.shape == (enc_N, B, num_head, S, S)
    # softmax rows sum to 1 (approx reciprocal on the EUP -> slightly loose tol)
    assert bool(jnp.allclose(jnp.sum(all_prob, axis=-1), 1.0, atol=5e-3))

    # compare against a plain-JAX reference using the same bf16 matmul inputs
    ref_prob, ref_out = encoder_forward_ref(tokens, emb_table, pe, params, num_head)
    assert bool(jnp.allclose(out, ref_out, atol=2e-2, rtol=2e-2))
    assert bool(jnp.allclose(all_prob, ref_prob, atol=1e-2, rtol=1e-2))

    print("KERNEL_OK")
</pallas_src>

<mosaic_0001>
module attributes {stable_mosaic.version = 11 : i64} {
  func.func @encoder_stack_kernel(%arg0: i32, %arg1: memref<2x8x32xf32, #tpu.memory_space<vmem>>, %arg2: memref<1x4x32x8xbf16, #tpu.memory_space<vmem>>, %arg3: memref<1x4x8xf32, #tpu.memory_space<vmem>>, %arg4: memref<1x4x32x8xbf16, #tpu.memory_space<vmem>>, %arg5: memref<1x4x8xf32, #tpu.memory_space<vmem>>, %arg6: memref<1x4x32x8xbf16, #tpu.memory_space<vmem>>, %arg7: memref<1x4x8xf32, #tpu.memory_space<vmem>>, %arg8: memref<1x4x8x32xbf16, #tpu.memory_space<vmem>>, %arg9: memref<1x1x32xf32, #tpu.memory_space<vmem>>, %arg10: memref<1x32x128xbf16, #tpu.memory_space<vmem>>, %arg11: memref<1x1x128xf32, #tpu.memory_space<vmem>>, %arg12: memref<1x128x32xbf16, #tpu.memory_space<vmem>>, %arg13: memref<1x1x32xf32, #tpu.memory_space<vmem>>, %arg14: memref<1x1x32xf32, #tpu.memory_space<vmem>>, %arg15: memref<1x1x32xf32, #tpu.memory_space<vmem>>, %arg16: memref<1x2x4x8x8xf32, #tpu.memory_space<vmem>>, %arg17: memref<2x8x32xf32, #tpu.memory_space<vmem>>, %arg18: memref<2x8x32xf32, #tpu.memory_space<vmem>>) attributes {dimension_semantics = [#tpu.dimension_semantics<arbitrary>], iteration_bounds = array<i64: 2>, scalar_prefetch = 0 : i64, scratch_operands = 1 : i64, tpu.core_type = #tpu.core_type<tc>, window_params = [{pipeline_mode = #tpu.pipeline_mode<synchronous>, transform_indices = @transform_0, window_bounds = array<i64: 2, 8, 32>}, {transform_indices = @transform_1, window_bounds = array<i64: 1, 4, 32, 8>}, {transform_indices = @transform_2, window_bounds = array<i64: 1, 4, 8>}, {transform_indices = @transform_3, window_bounds = array<i64: 1, 4, 32, 8>}, {transform_indices = @transform_4, window_bounds = array<i64: 1, 4, 8>}, {transform_indices = @transform_5, window_bounds = array<i64: 1, 4, 32, 8>}, {transform_indices = @transform_6, window_bounds = array<i64: 1, 4, 8>}, {transform_indices = @transform_7, window_bounds = array<i64: 1, 4, 8, 32>}, {transform_indices = @transform_8, window_bounds = array<i64: 1, 1, 32>}, {transform_indices = @transform_9, window_bounds = array<i64: 1, 32, 128>}, {transform_indices = @transform_10, window_bounds = array<i64: 1, 1, 128>}, {transform_indices = @transform_11, window_bounds = array<i64: 1, 128, 32>}, {transform_indices = @transform_12, window_bounds = array<i64: 1, 1, 32>}, {transform_indices = @transform_13, window_bounds = array<i64: 1, 1, 32>}, {transform_indices = @transform_14, window_bounds = array<i64: 1, 1, 32>}, {transform_indices = @transform_15, window_bounds = array<i64: 1, 2, 4, 8, 8>}, {pipeline_mode = #tpu.pipeline_mode<synchronous>, transform_indices = @transform_16, window_bounds = array<i64: 2, 8, 32>}]} {
    %c0_i32 = arith.constant 0 : i32
    %0 = arith.cmpi eq, %arg0, %c0_i32 : i32
    %1 = arith.extui %0 : i1 to i32
    %c0_i32_0 = arith.constant 0 : i32
    %2 = arith.cmpi ne, %1, %c0_i32_0 : i32
    scf.if %2 {
      %c0_179 = arith.constant 0 : index
      %c0_180 = arith.constant 0 : index
      %c0_181 = arith.constant 0 : index
      %303 = vector.load %arg1[%c0_179, %c0_180, %c0_181] : memref<2x8x32xf32, #tpu.memory_space<vmem>>, vector<2x8x32xf32>
      %c0_182 = arith.constant 0 : index
      %c0_183 = arith.constant 0 : index
      %c0_184 = arith.constant 0 : index
      %304 = vector.load %arg18[%c0_182, %c0_183, %c0_184] : memref<2x8x32xf32, #tpu.memory_space<vmem>>, vector<2x8x32xf32>
      tpu.vector_store %arg18[%c0_182, %c0_183, %c0_184], %303 {strides = array<i32>} : memref<2x8x32xf32, #tpu.memory_space<vmem>>, vector<2x8x32xf32>,
    } else {
    }
    %c0 = arith.constant 0 : index
    %c0_1 = arith.constant 0 : index
    %c0_2 = arith.constant 0 : index
    %3 = vector.load %arg18[%c0, %c0_1, %c0_2] : memref<2x8x32xf32, #tpu.memory_space<vmem>>, vector<2x8x32xf32>
    %4 = vector.shape_cast %3 : vector<2x8x32xf32> to vector<16x32xf32>
    %5 = arith.truncf %4 : vector<16x32xf32> to vector<16x32xbf16>
    %c0_3 = arith.constant 0 : index
    %c0_4 = arith.constant 0 : index
    %c0_5 = arith.constant 0 : index
    %6 = vector.load %arg14[%c0_3, %c0_4, %c0_5] : memref<1x1x32xf32, #tpu.memory_space<vmem>>, vector<1x1x32xf32>
    %7 = vector.shape_cast %6 : vector<1x1x32xf32> to vector<32xf32>
    %c0_6 = arith.constant 0 : index
    %c0_7 = arith.constant 0 : index
    %c0_8 = arith.constant 0 : index
    %8 = vector.load %arg15[%c0_6, %c0_7, %c0_8] : memref<1x1x32xf32, #tpu.memory_space<vmem>>, vector<1x1x32xf32>
    %9 = vector.shape_cast %8 : vector<1x1x32xf32> to vector<32xf32>
    %cst = arith.constant 0.000000e+00 : f32
    %10 = vector.broadcast %cst : f32 to vector<16x32xf32>
    %c0_9 = arith.constant 0 : index
    %c0_10 = arith.constant 0 : index
    %c0_11 = arith.constant 0 : index
    %c0_12 = arith.constant 0 : index
    %11 = vector.load %arg2[%c0_9, %c0_10, %c0_11, %c0_12] : memref<1x4x32x8xbf16, #tpu.memory_space<vmem>>, vector<1x1x32x8xbf16>
    %12 = vector.shape_cast %11 : vector<1x1x32x8xbf16> to vector<32x8xbf16>
    %cst_13 = arith.constant dense<0.000000e+00> : vector<16x8xf32>
    %13 = tpu.matmul %5, %12, %cst_13 {dimension_numbers = #tpu.dot_dimension_numbers<[1], [0], [0], [1], [0, 0, 1, 1], [], []>} : vector<16x32xbf16>, vector<32x8xbf16>, vector<16x8xf32> -> vector<16x8xf32>
    %c0_14 = arith.constant 0 : index
    %c0_15 = arith.constant 0 : index
    %c0_16 = arith.constant 0 : index
    %14 = vector.load %arg3[%c0_14, %c0_15, %c0_16] : memref<1x4x8xf32, #tpu.memory_space<vmem>>, vector<1x1x8xf32>
    %15 = vector.shape_cast %14 : vector<1x1x8xf32> to vector<8xf32>
    %16 = vector.shape_cast %15 : vector<8xf32> to vector<1x8xf32>
    %17 = vector.broadcast %16 : vector<1x8xf32> to vector<16x8xf32>
    %18 = arith.addf %13, %17 : vector<16x8xf32>
    %c0_17 = arith.constant 0 : index
    %c0_18 = arith.constant 0 : index
    %c0_19 = arith.constant 0 : index
    %c0_20 = arith.constant 0 : index
    %19 = vector.load %arg4[%c0_17, %c0_18, %c0_19, %c0_20] : memref<1x4x32x8xbf16, #tpu.memory_space<vmem>>, vector<1x1x32x8xbf16>
    %20 = vector.shape_cast %19 : vector<1x1x32x8xbf16> to vector<32x8xbf16>
    %cst_21 = arith.constant dense<0.000000e+00> : vector<16x8xf32>
    %21 = tpu.matmul %5, %20, %cst_21 {dimension_numbers = #tpu.dot_dimension_numbers<[1], [0], [0], [1], [0, 0, 1, 1], [], []>} : vector<16x32xbf16>, vector<32x8xbf16>, vector<16x8xf32> -> vector<16x8xf32>
    %c0_22 = arith.constant 0 : index
    %c0_23 = arith.constant 0 : index
    %c0_24 = arith.constant 0 : index
    %22 = vector.load %arg5[%c0_22, %c0_23, %c0_24] : memref<1x4x8xf32, #tpu.memory_space<vmem>>, vector<1x1x8xf32>
    %23 = vector.shape_cast %22 : vector<1x1x8xf32> to vector<8xf32>
    %24 = vector.shape_cast %23 : vector<8xf32> to vector<1x8xf32>
    %25 = vector.broadcast %24 : vector<1x8xf32> to vector<16x8xf32>
    %26 = arith.addf %21, %25 : vector<16x8xf32>
    %c0_25 = arith.constant 0 : index
    %c0_26 = arith.constant 0 : index
    %c0_27 = arith.constant 0 : index
    %c0_28 = arith.constant 0 : index
    %27 = vector.load %arg6[%c0_25, %c0_26, %c0_27, %c0_28] : memref<1x4x32x8xbf16, #tpu.memory_space<vmem>>, vector<1x1x32x8xbf16>
    %28 = vector.shape_cast %27 : vector<1x1x32x8xbf16> to vector<32x8xbf16>
    %cst_29 = arith.constant dense<0.000000e+00> : vector<16x8xf32>
    %29 = tpu.matmul %5, %28, %cst_29 {dimension_numbers = #tpu.dot_dimension_numbers<[1], [0], [0], [1], [0, 0, 1, 1], [], []>} : vector<16x32xbf16>, vector<32x8xbf16>, vector<16x8xf32> -> vector<16x8xf32>
    %c0_30 = arith.constant 0 : index
    %c0_31 = arith.constant 0 : index
    %c0_32 = arith.constant 0 : index
    %30 = vector.load %arg7[%c0_30, %c0_31, %c0_32] : memref<1x4x8xf32, #tpu.memory_space<vmem>>, vector<1x1x8xf32>
    %31 = vector.shape_cast %30 : vector<1x1x8xf32> to vector<8xf32>
    %32 = vector.shape_cast %31 : vector<8xf32> to vector<1x8xf32>
    %33 = vector.broadcast %32 : vector<1x8xf32> to vector<16x8xf32>
    %34 = arith.addf %29, %33 : vector<16x8xf32>
    %cst_33 = arith.constant 0.176776692 : f32
    %35 = vector.broadcast %cst_33 : f32 to vector<16x8xf32>
    %36 = arith.mulf %18, %35 : vector<16x8xf32>
    %37 = vector.shape_cast %36 : vector<16x8xf32> to vector<2x8x8xf32>
    %38 = arith.truncf %37 : vector<2x8x8xf32> to vector<2x8x8xbf16>
    %39 = vector.shape_cast %26 : vector<16x8xf32> to vector<2x8x8xf32>
    %40 = arith.truncf %39 : vector<2x8x8xf32> to vector<2x8x8xbf16>
    %41 = vector.shape_cast %34 : vector<16x8xf32> to vector<2x8x8xf32>
    %42 = arith.truncf %41 : vector<2x8x8xf32> to vector<2x8x8xbf16>
    "tpu.trace_start"() <{level = 10 : i32, message = "bqd,bkd->bqk"}> : () -> ()
    %cst_34 = arith.constant dense<0.000000e+00> : vector<2x8x8xf32>
    %43 = tpu.matmul %38, %40, %cst_34 {dimension_numbers = #tpu.dot_dimension_numbers<[2], [2], [1], [1], [0, 0, 0, 1, 1, 1], [0], [0]>} : vector<2x8x8xbf16>, vector<2x8x8xbf16>, vector<2x8x8xf32> -> vector<2x8x8xf32>
    "tpu.trace_stop"() : () -> ()
    %cst_35 = arith.constant dense<0xFF800000> : vector<2x8xf32>
    %44 = vector.multi_reduction <maximumf>, %43, %cst_35 [2] : vector<2x8x8xf32> to vector<2x8xf32>
    %45 = vector.shape_cast %44 : vector<2x8xf32> to vector<2x8x1xf32>
    %46 = vector.broadcast %45 : vector<2x8x1xf32> to vector<2x8x8xf32>
    %47 = arith.subf %43, %46 : vector<2x8x8xf32>
    %48 = math.exp %47 : vector<2x8x8xf32>
    %cst_36 = arith.constant dense<0.000000e+00> : vector<2x8xf32>
    %49 = vector.multi_reduction <add>, %48, %cst_36 [2] : vector<2x8x8xf32> to vector<2x8xf32>
    %50 = vector.shape_cast %49 : vector<2x8xf32> to vector<2x8x1xf32>
    %51 = tpu.reciprocal %50 {approx = true} : vector<2x8x1xf32> -> vector<2x8x1xf32>
    %52 = vector.broadcast %51 : vector<2x8x1xf32> to vector<2x8x8xf32>
    %53 = arith.mulf %48, %52 : vector<2x8x8xf32>
    %54 = arith.truncf %53 : vector<2x8x8xf32> to vector<2x8x8xbf16>
    "tpu.trace_start"() <{level = 10 : i32, message = "bqk,bkd->bqd"}> : () -> ()
    %cst_37 = arith.constant dense<0.000000e+00> : vector<2x8x8xf32>
    %55 = tpu.matmul %54, %42, %cst_37 {dimension_numbers = #tpu.dot_dimension_numbers<[2], [1], [1], [2], [0, 0, 0, 1, 1, 2], [0], [0]>} : vector<2x8x8xbf16>, vector<2x8x8xbf16>, vector<2x8x8xf32> -> vector<2x8x8xf32>
    "tpu.trace_stop"() : () -> ()
    %56 = vector.shape_cast %55 : vector<2x8x8xf32> to vector<16x8xf32>
    %57 = arith.truncf %56 : vector<16x8xf32> to vector<16x8xbf16>
    %c0_38 = arith.constant 0 : index
    %c0_39 = arith.constant 0 : index
    %c0_40 = arith.constant 0 : index
    %c0_41 = arith.constant 0 : index
    %58 = vector.load %arg8[%c0_38, %c0_39, %c0_40, %c0_41] : memref<1x4x8x32xbf16, #tpu.memory_space<vmem>>, vector<1x1x8x32xbf16>
    %59 = vector.shape_cast %58 : vector<1x1x8x32xbf16> to vector<8x32xbf16>
    %cst_42 = arith.constant dense<0.000000e+00> : vector<16x32xf32>
    %60 = tpu.matmul %57, %59, %cst_42 {dimension_numbers = #tpu.dot_dimension_numbers<[1], [0], [0], [1], [0, 0, 1, 1], [], []>} : vector<16x8xbf16>, vector<8x32xbf16>, vector<16x32xf32> -> vector<16x32xf32>
    %61 = arith.addf %10, %60 : vector<16x32xf32>
    %c0_43 = arith.constant 0 : index
    %c1 = arith.constant 1 : index
    %c0_44 = arith.constant 0 : index
    %c0_45 = arith.constant 0 : index
    %62 = vector.load %arg2[%c0_43, %c1, %c0_44, %c0_45] : memref<1x4x32x8xbf16, #tpu.memory_space<vmem>>, vector<1x1x32x8xbf16>
    %63 = vector.shape_cast %62 : vector<1x1x32x8xbf16> to vector<32x8xbf16>
    %cst_46 = arith.constant dense<0.000000e+00> : vector<16x8xf32>
    %64 = tpu.matmul %5, %63, %cst_46 {dimension_numbers = #tpu.dot_dimension_numbers<[1], [0], [0], [1], [0, 0, 1, 1], [], []>} : vector<16x32xbf16>, vector<32x8xbf16>, vector<16x8xf32> -> vector<16x8xf32>
    %c0_47 = arith.constant 0 : index
    %c1_48 = arith.constant 1 : index
    %c0_49 = arith.constant 0 : index
    %65 = vector.load %arg3[%c0_47, %c1_48, %c0_49] : memref<1x4x8xf32, #tpu.memory_space<vmem>>, vector<1x1x8xf32>
    %66 = vector.shape_cast %65 : vector<1x1x8xf32> to vector<8xf32>
    %67 = vector.shape_cast %66 : vector<8xf32> to vector<1x8xf32>
    %68 = vector.broadcast %67 : vector<1x8xf32> to vector<16x8xf32>
    %69 = arith.addf %64, %68 : vector<16x8xf32>
    %c0_50 = arith.constant 0 : index
    %c1_51 = arith.constant 1 : index
    %c0_52 = arith.constant 0 : index
    %c0_53 = arith.constant 0 : index
    %70 = vector.load %arg4[%c0_50, %c1_51, %c0_52, %c0_53] : memref<1x4x32x8xbf16, #tpu.memory_space<vmem>>, vector<1x1x32x8xbf16>
    %71 = vector.shape_cast %70 : vector<1x1x32x8xbf16> to vector<32x8xbf16>
    %cst_54 = arith.constant dense<0.000000e+00> : vector<16x8xf32>
    %72 = tpu.matmul %5, %71, %cst_54 {dimension_numbers = #tpu.dot_dimension_numbers<[1], [0], [0], [1], [0, 0, 1, 1], [], []>} : vector<16x32xbf16>, vector<32x8xbf16>, vector<16x8xf32> -> vector<16x8xf32>
    %c0_55 = arith.constant 0 : index
    %c1_56 = arith.constant 1 : index
    %c0_57 = arith.constant 0 : index
    %73 = vector.load %arg5[%c0_55, %c1_56, %c0_57] : memref<1x4x8xf32, #tpu.memory_space<vmem>>, vector<1x1x8xf32>
    %74 = vector.shape_cast %73 : vector<1x1x8xf32> to vector<8xf32>
    %75 = vector.shape_cast %74 : vector<8xf32> to vector<1x8xf32>
    %76 = vector.broadcast %75 : vector<1x8xf32> to vector<16x8xf32>
    %77 = arith.addf %72, %76 : vector<16x8xf32>
    %c0_58 = arith.constant 0 : index
    %c1_59 = arith.constant 1 : index
    %c0_60 = arith.constant 0 : index
    %c0_61 = arith.constant 0 : index
    %78 = vector.load %arg6[%c0_58, %c1_59, %c0_60, %c0_61] : memref<1x4x32x8xbf16, #tpu.memory_space<vmem>>, vector<1x1x32x8xbf16>
    %79 = vector.shape_cast %78 : vector<1x1x32x8xbf16> to vector<32x8xbf16>
    %cst_62 = arith.constant dense<0.000000e+00> : vector<16x8xf32>
    %80 = tpu.matmul %5, %79, %cst_62 {dimension_numbers = #tpu.dot_dimension_numbers<[1], [0], [0], [1], [0, 0, 1, 1], [], []>} : vector<16x32xbf16>, vector<32x8xbf16>, vector<16x8xf32> -> vector<16x8xf32>
    %c0_63 = arith.constant 0 : index
    %c1_64 = arith.constant 1 : index
    %c0_65 = arith.constant 0 : index
    %81 = vector.load %arg7[%c0_63, %c1_64, %c0_65] : memref<1x4x8xf32, #tpu.memory_space<vmem>>, vector<1x1x8xf32>
    %82 = vector.shape_cast %81 : vector<1x1x8xf32> to vector<8xf32>
    %83 = vector.shape_cast %82 : vector<8xf32> to vector<1x8xf32>
    %84 = vector.broadcast %83 : vector<1x8xf32> to vector<16x8xf32>
    %85 = arith.addf %80, %84 : vector<16x8xf32>
    %cst_66 = arith.constant 0.176776692 : f32
    %86 = vector.broadcast %cst_66 : f32 to vector<16x8xf32>
    %87 = arith.mulf %69, %86 : vector<16x8xf32>
    %88 = vector.shape_cast %87 : vector<16x8xf32> to vector<2x8x8xf32>
    %89 = arith.truncf %88 : vector<2x8x8xf32> to vector<2x8x8xbf16>
    %90 = vector.shape_cast %77 : vector<16x8xf32> to vector<2x8x8xf32>
    %91 = arith.truncf %90 : vector<2x8x8xf32> to vector<2x8x8xbf16>
    %92 = vector.shape_cast %85 : vector<16x8xf32> to vector<2x8x8xf32>
    %93 = arith.truncf %92 : vector<2x8x8xf32> to vector<2x8x8xbf16>
    "tpu.trace_start"() <{level = 10 : i32, message = "bqd,bkd->bqk"}> : () -> ()
    %cst_67 = arith.constant dense<0.000000e+00> : vector<2x8x8xf32>
    %94 = tpu.matmul %89, %91, %cst_67 {dimension_numbers = #tpu.dot_dimension_numbers<[2], [2], [1], [1], [0, 0, 0, 1, 1, 1], [0], [0]>} : vector<2x8x8xbf16>, vector<2x8x8xbf16>, vector<2x8x8xf32> -> vector<2x8x8xf32>
    "tpu.trace_stop"() : () -> ()
    %cst_68 = arith.constant dense<0xFF800000> : vector<2x8xf32>
    %95 = vector.multi_reduction <maximumf>, %94, %cst_68 [2] : vector<2x8x8xf32> to vector<2x8xf32>
    %96 = vector.shape_cast %95 : vector<2x8xf32> to vector<2x8x1xf32>
    %97 = vector.broadcast %96 : vector<2x8x1xf32> to vector<2x8x8xf32>
    %98 = arith.subf %94, %97 : vector<2x8x8xf32>
    %99 = math.exp %98 : vector<2x8x8xf32>
    %cst_69 = arith.constant dense<0.000000e+00> : vector<2x8xf32>
    %100 = vector.multi_reduction <add>, %99, %cst_69 [2] : vector<2x8x8xf32> to vector<2x8xf32>
    %101 = vector.shape_cast %100 : vector<2x8xf32> to vector<2x8x1xf32>
    %102 = tpu.reciprocal %101 {approx = true} : vector<2x8x1xf32> -> vector<2x8x1xf32>
    %103 = vector.broadcast %102 : vector<2x8x1xf32> to vector<2x8x8xf32>
    %104 = arith.mulf %99, %103 : vector<2x8x8xf32>
    %105 = arith.truncf %104 : vector<2x8x8xf32> to vector<2x8x8xbf16>
    "tpu.trace_start"() <{level = 10 : i32, message = "bqk,bkd->bqd"}> : () -> ()
    %cst_70 = arith.constant dense<0.000000e+00> : vector<2x8x8xf32>
    %106 = tpu.matmul %105, %93, %cst_70 {dimension_numbers = #tpu.dot_dimension_numbers<[2], [1], [1], [2], [0, 0, 0, 1, 1, 2], [0], [0]>} : vector<2x8x8xbf16>, vector<2x8x8xbf16>, vector<2x8x8xf32> -> vector<2x8x8xf32>
    "tpu.trace_stop"() : () -> ()
    %107 = vector.shape_cast %106 : vector<2x8x8xf32> to vector<16x8xf32>
    %108 = arith.truncf %107 : vector<16x8xf32> to vector<16x8xbf16>
    %c0_71 = arith.constant 0 : index
    %c1_72 = arith.constant 1 : index
    %c0_73 = arith.constant 0 : index
    %c0_74 = arith.constant 0 : index
    %109 = vector.load %arg8[%c0_71, %c1_72, %c0_73, %c0_74] : memref<1x4x8x32xbf16, #tpu.memory_space<vmem>>, vector<1x1x8x32xbf16>
    %110 = vector.shape_cast %109 : vector<1x1x8x32xbf16> to vector<8x32xbf16>
    %cst_75 = arith.constant dense<0.000000e+00> : vector<16x32xf32>
    %111 = tpu.matmul %108, %110, %cst_75 {dimension_numbers = #tpu.dot_dimension_numbers<[1], [0], [0], [1], [0, 0, 1, 1], [], []>} : vector<16x8xbf16>, vector<8x32xbf16>, vector<16x32xf32> -> vector<16x32xf32>
    %112 = arith.addf %61, %111 : vector<16x32xf32>
    %c0_76 = arith.constant 0 : index
    %c2 = arith.constant 2 : index
    %c0_77 = arith.constant 0 : index
    %c0_78 = arith.constant 0 : index
    %113 = vector.load %arg2[%c0_76, %c2, %c0_77, %c0_78] : memref<1x4x32x8xbf16, #tpu.memory_space<vmem>>, vector<1x1x32x8xbf16>
    %114 = vector.shape_cast %113 : vector<1x1x32x8xbf16> to vector<32x8xbf16>
    %cst_79 = arith.constant dense<0.000000e+00> : vector<16x8xf32>
    %115 = tpu.matmul %5, %114, %cst_79 {dimension_numbers = #tpu.dot_dimension_numbers<[1], [0], [0], [1], [0, 0, 1, 1], [], []>} : vector<16x32xbf16>, vector<32x8xbf16>, vector<16x8xf32> -> vector<16x8xf32>
    %c0_80 = arith.constant 0 : index
    %c2_81 = arith.constant 2 : index
    %c0_82 = arith.constant 0 : index
    %116 = vector.load %arg3[%c0_80, %c2_81, %c0_82] : memref<1x4x8xf32, #tpu.memory_space<vmem>>, vector<1x1x8xf32>
    %117 = vector.shape_cast %116 : vector<1x1x8xf32> to vector<8xf32>
    %118 = vector.shape_cast %117 : vector<8xf32> to vector<1x8xf32>
    %119 = vector.broadcast %118 : vector<1x8xf32> to vector<16x8xf32>
    %120 = arith.addf %115, %119 : vector<16x8xf32>
    %c0_83 = arith.constant 0 : index
    %c2_84 = arith.constant 2 : index
    %c0_85 = arith.constant 0 : index
    %c0_86 = arith.constant 0 : index
    %121 = vector.load %arg4[%c0_83, %c2_84, %c0_85, %c0_86] : memref<1x4x32x8xbf16, #tpu.memory_space<vmem>>, vector<1x1x32x8xbf16>
    %122 = vector.shape_cast %121 : vector<1x1x32x8xbf16> to vector<32x8xbf16>
    %cst_87 = arith.constant dense<0.000000e+00> : vector<16x8xf32>
    %123 = tpu.matmul %5, %122, %cst_87 {dimension_numbers = #tpu.dot_dimension_numbers<[1], [0], [0], [1], [0, 0, 1, 1], [], []>} : vector<16x32xbf16>, vector<32x8xbf16>, vector<16x8xf32> -> vector<16x8xf32>
    %c0_88 = arith.constant 0 : index
    %c2_89 = arith.constant 2 : index
    %c0_90 = arith.constant 0 : index
    %124 = vector.load %arg5[%c0_88, %c2_89, %c0_90] : memref<1x4x8xf32, #tpu.memory_space<vmem>>, vector<1x1x8xf32>
    %125 = vector.shape_cast %124 : vector<1x1x8xf32> to vector<8xf32>
    %126 = vector.shape_cast %125 : vector<8xf32> to vector<1x8xf32>
    %127 = vector.broadcast %126 : vector<1x8xf32> to vector<16x8xf32>
    %128 = arith.addf %123, %127 : vector<16x8xf32>
    %c0_91 = arith.constant 0 : index
    %c2_92 = arith.constant 2 : index
    %c0_93 = arith.constant 0 : index
    %c0_94 = arith.constant 0 : index
    %129 = vector.load %arg6[%c0_91, %c2_92, %c0_93, %c0_94] : memref<1x4x32x8xbf16, #tpu.memory_space<vmem>>, vector<1x1x32x8xbf16>
    %130 = vector.shape_cast %129 : vector<1x1x32x8xbf16> to vector<32x8xbf16>
    %cst_95 = arith.constant dense<0.000000e+00> : vector<16x8xf32>
    %131 = tpu.matmul %5, %130, %cst_95 {dimension_numbers = #tpu.dot_dimension_numbers<[1], [0], [0], [1], [0, 0, 1, 1], [], []>} : vector<16x32xbf16>, vector<32x8xbf16>, vector<16x8xf32> -> vector<16x8xf32>
    %c0_96 = arith.constant 0 : index
    %c2_97 = arith.constant 2 : index
    %c0_98 = arith.constant 0 : index
    %132 = vector.load %arg7[%c0_96, %c2_97, %c0_98] : memref<1x4x8xf32, #tpu.memory_space<vmem>>, vector<1x1x8xf32>
    %133 = vector.shape_cast %132 : vector<1x1x8xf32> to vector<8xf32>
    %134 = vector.shape_cast %133 : vector<8xf32> to vector<1x8xf32>
    %135 = vector.broadcast %134 : vector<1x8xf32> to vector<16x8xf32>
    %136 = arith.addf %131, %135 : vector<16x8xf32>
    %cst_99 = arith.constant 0.176776692 : f32
    %137 = vector.broadcast %cst_99 : f32 to vector<16x8xf32>
    %138 = arith.mulf %120, %137 : vector<16x8xf32>
    %139 = vector.shape_cast %138 : vector<16x8xf32> to vector<2x8x8xf32>
    %140 = arith.truncf %139 : vector<2x8x8xf32> to vector<2x8x8xbf16>
    %141 = vector.shape_cast %128 : vector<16x8xf32> to vector<2x8x8xf32>
    %142 = arith.truncf %141 : vector<2x8x8xf32> to vector<2x8x8xbf16>
    %143 = vector.shape_cast %136 : vector<16x8xf32> to vector<2x8x8xf32>
    %144 = arith.truncf %143 : vector<2x8x8xf32> to vector<2x8x8xbf16>
    "tpu.trace_start"() <{level = 10 : i32, message = "bqd,bkd->bqk"}> : () -> ()
    %cst_100 = arith.constant dense<0.000000e+00> : vector<2x8x8xf32>
    %145 = tpu.matmul %140, %142, %cst_100 {dimension_numbers = #tpu.dot_dimension_numbers<[2], [2], [1], [1], [0, 0, 0, 1, 1, 1], [0], [0]>} : vector<2x8x8xbf16>, vector<2x8x8xbf16>, vector<2x8x8xf32> -> vector<2x8x8xf32>
    "tpu.trace_stop"() : () -> ()
    %cst_101 = arith.constant dense<0xFF800000> : vector<2x8xf32>
    %146 = vector.multi_reduction <maximumf>, %145, %cst_101 [2] : vector<2x8x8xf32> to vector<2x8xf32>
    %147 = vector.shape_cast %146 : vector<2x8xf32> to vector<2x8x1xf32>
    %148 = vector.broadcast %147 : vector<2x8x1xf32> to vector<2x8x8xf32>
    %149 = arith.subf %145, %148 : vector<2x8x8xf32>
    %150 = math.exp %149 : vector<2x8x8xf32>
    %cst_102 = arith.constant dense<0.000000e+00> : vector<2x8xf32>
    %151 = vector.multi_reduction <add>, %150, %cst_102 [2] : vector<2x8x8xf32> to vector<2x8xf32>
    %152 = vector.shape_cast %151 : vector<2x8xf32> to vector<2x8x1xf32>
    %153 = tpu.reciprocal %152 {approx = true} : vector<2x8x1xf32> -> vector<2x8x1xf32>
    %154 = vector.broadcast %153 : vector<2x8x1xf32> to vector<2x8x8xf32>
    %155 = arith.mulf %150, %154 : vector<2x8x8xf32>
    %156 = arith.truncf %155 : vector<2x8x8xf32> to vector<2x8x8xbf16>
    "tpu.trace_start"() <{level = 10 : i32, message = "bqk,bkd->bqd"}> : () -> ()
    %cst_103 = arith.constant dense<0.000000e+00> : vector<2x8x8xf32>
    %157 = tpu.matmul %156, %144, %cst_103 {dimension_numbers = #tpu.dot_dimension_numbers<[2], [1], [1], [2], [0, 0, 0, 1, 1, 2], [0], [0]>} : vector<2x8x8xbf16>, vector<2x8x8xbf16>, vector<2x8x8xf32> -> vector<2x8x8xf32>
    "tpu.trace_stop"() : () -> ()
    %158 = vector.shape_cast %157 : vector<2x8x8xf32> to vector<16x8xf32>
    %159 = arith.truncf %158 : vector<16x8xf32> to vector<16x8xbf16>
    %c0_104 = arith.constant 0 : index
    %c2_105 = arith.constant 2 : index
    %c0_106 = arith.constant 0 : index
    %c0_107 = arith.constant 0 : index
    %160 = vector.load %arg8[%c0_104, %c2_105, %c0_106, %c0_107] : memref<1x4x8x32xbf16, #tpu.memory_space<vmem>>, vector<1x1x8x32xbf16>
    %161 = vector.shape_cast %160 : vector<1x1x8x32xbf16> to vector<8x32xbf16>
    %cst_108 = arith.constant dense<0.000000e+00> : vector<16x32xf32>
    %162 = tpu.matmul %159, %161, %cst_108 {dimension_numbers = #tpu.dot_dimension_numbers<[1], [0], [0], [1], [0, 0, 1, 1], [], []>} : vector<16x8xbf16>, vector<8x32xbf16>, vector<16x32xf32> -> vector<16x32xf32>
    %163 = arith.addf %112, %162 : vector<16x32xf32>
    %c0_109 = arith.constant 0 : index
    %c3 = arith.constant 3 : index
    %c0_110 = arith.constant 0 : index
    %c0_111 = arith.constant 0 : index
    %164 = vector.load %arg2[%c0_109, %c3, %c0_110, %c0_111] : memref<1x4x32x8xbf16, #tpu.memory_space<vmem>>, vector<1x1x32x8xbf16>
    %165 = vector.shape_cast %164 : vector<1x1x32x8xbf16> to vector<32x8xbf16>
    %cst_112 = arith.constant dense<0.000000e+00> : vector<16x8xf32>
    %166 = tpu.matmul %5, %165, %cst_112 {dimension_numbers = #tpu.dot_dimension_numbers<[1], [0], [0], [1], [0, 0, 1, 1], [], []>} : vector<16x32xbf16>, vector<32x8xbf16>, vector<16x8xf32> -> vector<16x8xf32>
    %c0_113 = arith.constant 0 : index
    %c3_114 = arith.constant 3 : index
    %c0_115 = arith.constant 0 : index
    %167 = vector.load %arg3[%c0_113, %c3_114, %c0_115] : memref<1x4x8xf32, #tpu.memory_space<vmem>>, vector<1x1x8xf32>
    %168 = vector.shape_cast %167 : vector<1x1x8xf32> to vector<8xf32>
    %169 = vector.shape_cast %168 : vector<8xf32> to vector<1x8xf32>
    %170 = vector.broadcast %169 : vector<1x8xf32> to vector<16x8xf32>
    %171 = arith.addf %166, %170 : vector<16x8xf32>
    %c0_116 = arith.constant 0 : index
    %c3_117 = arith.constant 3 : index
    %c0_118 = arith.constant 0 : index
    %c0_119 = arith.constant 0 : index
    %172 = vector.load %arg4[%c0_116, %c3_117, %c0_118, %c0_119] : memref<1x4x32x8xbf16, #tpu.memory_space<vmem>>, vector<1x1x32x8xbf16>
    %173 = vector.shape_cast %172 : vector<1x1x32x8xbf16> to vector<32x8xbf16>
    %cst_120 = arith.constant dense<0.000000e+00> : vector<16x8xf32>
    %174 = tpu.matmul %5, %173, %cst_120 {dimension_numbers = #tpu.dot_dimension_numbers<[1], [0], [0], [1], [0, 0, 1, 1], [], []>} : vector<16x32xbf16>, vector<32x8xbf16>, vector<16x8xf32> -> vector<16x8xf32>
    %c0_121 = arith.constant 0 : index
    %c3_122 = arith.constant 3 : index
    %c0_123 = arith.constant 0 : index
    %175 = vector.load %arg5[%c0_121, %c3_122, %c0_123] : memref<1x4x8xf32, #tpu.memory_space<vmem>>, vector<1x1x8xf32>
    %176 = vector.shape_cast %175 : vector<1x1x8xf32> to vector<8xf32>
    %177 = vector.shape_cast %176 : vector<8xf32> to vector<1x8xf32>
    %178 = vector.broadcast %177 : vector<1x8xf32> to vector<16x8xf32>
    %179 = arith.addf %174, %178 : vector<16x8xf32>
    %c0_124 = arith.constant 0 : index
    %c3_125 = arith.constant 3 : index
    %c0_126 = arith.constant 0 : index
    %c0_127 = arith.constant 0 : index
    %180 = vector.load %arg6[%c0_124, %c3_125, %c0_126, %c0_127] : memref<1x4x32x8xbf16, #tpu.memory_space<vmem>>, vector<1x1x32x8xbf16>
    %181 = vector.shape_cast %180 : vector<1x1x32x8xbf16> to vector<32x8xbf16>
    %cst_128 = arith.constant dense<0.000000e+00> : vector<16x8xf32>
    %182 = tpu.matmul %5, %181, %cst_128 {dimension_numbers = #tpu.dot_dimension_numbers<[1], [0], [0], [1], [0, 0, 1, 1], [], []>} : vector<16x32xbf16>, vector<32x8xbf16>, vector<16x8xf32> -> vector<16x8xf32>
    %c0_129 = arith.constant 0 : index
    %c3_130 = arith.constant 3 : index
    %c0_131 = arith.constant 0 : index
    %183 = vector.load %arg7[%c0_129, %c3_130, %c0_131] : memref<1x4x8xf32, #tpu.memory_space<vmem>>, vector<1x1x8xf32>
    %184 = vector.shape_cast %183 : vector<1x1x8xf32> to vector<8xf32>
    %185 = vector.shape_cast %184 : vector<8xf32> to vector<1x8xf32>
    %186 = vector.broadcast %185 : vector<1x8xf32> to vector<16x8xf32>
    %187 = arith.addf %182, %186 : vector<16x8xf32>
    %cst_132 = arith.constant 0.176776692 : f32
    %188 = vector.broadcast %cst_132 : f32 to vector<16x8xf32>
    %189 = arith.mulf %171, %188 : vector<16x8xf32>
    %190 = vector.shape_cast %189 : vector<16x8xf32> to vector<2x8x8xf32>
    %191 = arith.truncf %190 : vector<2x8x8xf32> to vector<2x8x8xbf16>
    %192 = vector.shape_cast %179 : vector<16x8xf32> to vector<2x8x8xf32>
    %193 = arith.truncf %192 : vector<2x8x8xf32> to vector<2x8x8xbf16>
    %194 = vector.shape_cast %187 : vector<16x8xf32> to vector<2x8x8xf32>
    %195 = arith.truncf %194 : vector<2x8x8xf32> to vector<2x8x8xbf16>
    "tpu.trace_start"() <{level = 10 : i32, message = "bqd,bkd->bqk"}> : () -> ()
    %cst_133 = arith.constant dense<0.000000e+00> : vector<2x8x8xf32>
    %196 = tpu.matmul %191, %193, %cst_133 {dimension_numbers = #tpu.dot_dimension_numbers<[2], [2], [1], [1], [0, 0, 0, 1, 1, 1], [0], [0]>} : vector<2x8x8xbf16>, vector<2x8x8xbf16>, vector<2x8x8xf32> -> vector<2x8x8xf32>
    "tpu.trace_stop"() : () -> ()
    %cst_134 = arith.constant dense<0xFF800000> : vector<2x8xf32>
    %197 = vector.multi_reduction <maximumf>, %196, %cst_134 [2] : vector<2x8x8xf32> to vector<2x8xf32>
    %198 = vector.shape_cast %197 : vector<2x8xf32> to vector<2x8x1xf32>
    %199 = vector.broadcast %198 : vector<2x8x1xf32> to vector<2x8x8xf32>
    %200 = arith.subf %196, %199 : vector<2x8x8xf32>
    %201 = math.exp %200 : vector<2x8x8xf32>
    %cst_135 = arith.constant dense<0.000000e+00> : vector<2x8xf32>
    %202 = vector.multi_reduction <add>, %201, %cst_135 [2] : vector<2x8x8xf32> to vector<2x8xf32>
    %203 = vector.shape_cast %202 : vector<2x8xf32> to vector<2x8x1xf32>
    %204 = tpu.reciprocal %203 {approx = true} : vector<2x8x1xf32> -> vector<2x8x1xf32>
    %205 = vector.broadcast %204 : vector<2x8x1xf32> to vector<2x8x8xf32>
    %206 = arith.mulf %201, %205 : vector<2x8x8xf32>
    %207 = arith.truncf %206 : vector<2x8x8xf32> to vector<2x8x8xbf16>
    "tpu.trace_start"() <{level = 10 : i32, message = "bqk,bkd->bqd"}> : () -> ()
    %cst_136 = arith.constant dense<0.000000e+00> : vector<2x8x8xf32>
    %208 = tpu.matmul %207, %195, %cst_136 {dimension_numbers = #tpu.dot_dimension_numbers<[2], [1], [1], [2], [0, 0, 0, 1, 1, 2], [0], [0]>} : vector<2x8x8xbf16>, vector<2x8x8xbf16>, vector<2x8x8xf32> -> vector<2x8x8xf32>
    "tpu.trace_stop"() : () -> ()
    %209 = vector.shape_cast %208 : vector<2x8x8xf32> to vector<16x8xf32>
    %210 = arith.truncf %209 : vector<16x8xf32> to vector<16x8xbf16>
    %c0_137 = arith.constant 0 : index
    %c3_138 = arith.constant 3 : index
    %c0_139 = arith.constant 0 : index
    %c0_140 = arith.constant 0 : index
    %211 = vector.load %arg8[%c0_137, %c3_138, %c0_139, %c0_140] : memref<1x4x8x32xbf16, #tpu.memory_space<vmem>>, vector<1x1x8x32xbf16>
    %212 = vector.shape_cast %211 : vector<1x1x8x32xbf16> to vector<8x32xbf16>
    %cst_141 = arith.constant dense<0.000000e+00> : vector<16x32xf32>
    %213 = tpu.matmul %210, %212, %cst_141 {dimension_numbers = #tpu.dot_dimension_numbers<[1], [0], [0], [1], [0, 0, 1, 1], [], []>} : vector<16x8xbf16>, vector<8x32xbf16>, vector<16x32xf32> -> vector<16x32xf32>
    %214 = arith.addf %163, %213 : vector<16x32xf32>
    %c0_142 = arith.constant 0 : index
    %c0_143 = arith.constant 0 : index
    %c0_144 = arith.constant 0 : index
    %215 = vector.load %arg9[%c0_142, %c0_143, %c0_144] : memref<1x1x32xf32, #tpu.memory_space<vmem>>, vector<1x1x32xf32>
    %216 = vector.shape_cast %215 : vector<1x1x32xf32> to vector<32xf32>
    %217 = vector.shape_cast %216 : vector<32xf32> to vector<1x32xf32>
    %218 = vector.broadcast %217 : vector<1x32xf32> to vector<16x32xf32>
    %219 = arith.addf %214, %218 : vector<16x32xf32>
    %220 = vector.shape_cast %53 : vector<2x8x8xf32> to vector<2x1x8x8xf32>
    %221 = vector.shape_cast %104 : vector<2x8x8xf32> to vector<2x1x8x8xf32>
    %222 = vector.shape_cast %155 : vector<2x8x8xf32> to vector<2x1x8x8xf32>
    %223 = vector.shape_cast %206 : vector<2x8x8xf32> to vector<2x1x8x8xf32>
    %224 = tpu.concatenate %220, %221, %222, %223 in 1 : vector<2x1x8x8xf32>, vector<2x1x8x8xf32>, vector<2x1x8x8xf32>, vector<2x1x8x8xf32> -> vector<2x4x8x8xf32>
    %c0_145 = arith.constant 0 : index
    %c0_146 = arith.constant 0 : index
    %c0_147 = arith.constant 0 : index
    %c0_148 = arith.constant 0 : index
    %c0_149 = arith.constant 0 : index
    %225 = vector.load %arg16[%c0_145, %c0_146, %c0_147, %c0_148, %c0_149] : memref<1x2x4x8x8xf32, #tpu.memory_space<vmem>>, vector<1x2x4x8x8xf32>
    %226 = vector.shape_cast %225 : vector<1x2x4x8x8xf32> to vector<2x4x8x8xf32>
    %227 = vector.shape_cast %224 : vector<2x4x8x8xf32> to vector<1x2x4x8x8xf32>
    tpu.vector_store %arg16[%c0_145, %c0_146, %c0_147, %c0_148, %c0_149], %227 {strides = array<i32>} : memref<1x2x4x8x8xf32, #tpu.memory_space<vmem>>, vector<1x2x4x8x8xf32>,
    %228 = arith.addf %4, %219 : vector<16x32xf32>
    %cst_150 = arith.constant dense<0.000000e+00> : vector<16xf32>
    %229 = vector.multi_reduction <add>, %228, %cst_150 [1] : vector<16x32xf32> to vector<16xf32>
    %230 = vector.shape_cast %229 : vector<16xf32> to vector<16x1xf32>
    %cst_151 = arith.constant 3.200000e+01 : f32
    %231 = vector.broadcast %cst_151 : f32 to vector<16x1xf32>
    %232 = arith.divf %230, %231 : vector<16x1xf32>
    %233 = vector.broadcast %232 : vector<16x1xf32> to vector<16x32xf32>
    %234 = arith.subf %228, %233 : vector<16x32xf32>
    %235 = arith.mulf %234, %234 : vector<16x32xf32>
    %cst_152 = arith.constant dense<0.000000e+00> : vector<16xf32>
    %236 = vector.multi_reduction <add>, %235, %cst_152 [1] : vector<16x32xf32> to vector<16xf32>
    %237 = vector.shape_cast %236 : vector<16xf32> to vector<16x1xf32>
    %cst_153 = arith.constant 3.200000e+01 : f32
    %238 = vector.broadcast %cst_153 : f32 to vector<16x1xf32>
    %239 = arith.divf %237, %238 : vector<16x1xf32>
    %240 = vector.broadcast %232 : vector<16x1xf32> to vector<16x32xf32>
    %241 = arith.subf %228, %240 : vector<16x32xf32>
    %cst_154 = arith.constant 9.99999997E-7 : f32
    %242 = vector.broadcast %cst_154 : f32 to vector<16x1xf32>
    %243 = arith.addf %239, %242 : vector<16x1xf32>
    %244 = math.rsqrt %243 : vector<16x1xf32>
    %245 = vector.broadcast %244 : vector<16x1xf32> to vector<16x32xf32>
    %246 = arith.mulf %241, %245 : vector<16x32xf32>
    %247 = vector.shape_cast %7 : vector<32xf32> to vector<1x32xf32>
    %248 = vector.broadcast %247 : vector<1x32xf32> to vector<16x32xf32>
    %249 = arith.mulf %246, %248 : vector<16x32xf32>
    %250 = vector.shape_cast %9 : vector<32xf32> to vector<1x32xf32>
    %251 = vector.broadcast %250 : vector<1x32xf32> to vector<16x32xf32>
    %252 = arith.addf %249, %251 : vector<16x32xf32>
    %253 = arith.truncf %252 : vector<16x32xf32> to vector<16x32xbf16>
    %c0_155 = arith.constant 0 : index
    %c0_156 = arith.constant 0 : index
    %c0_157 = arith.constant 0 : index
    %254 = vector.load %arg10[%c0_155, %c0_156, %c0_157] : memref<1x32x128xbf16, #tpu.memory_space<vmem>>, vector<1x32x128xbf16>
    %255 = vector.shape_cast %254 : vector<1x32x128xbf16> to vector<32x128xbf16>
    %cst_158 = arith.constant dense<0.000000e+00> : vector<16x128xf32>
    %256 = tpu.matmul %253, %255, %cst_158 {dimension_numbers = #tpu.dot_dimension_numbers<[1], [0], [0], [1], [0, 0, 1, 1], [], []>} : vector<16x32xbf16>, vector<32x128xbf16>, vector<16x128xf32> -> vector<16x128xf32>
    %c0_159 = arith.constant 0 : index
    %c0_160 = arith.constant 0 : index
    %c0_161 = arith.constant 0 : index
    %257 = vector.load %arg11[%c0_159, %c0_160, %c0_161] : memref<1x1x128xf32, #tpu.memory_space<vmem>>, vector<1x1x128xf32>
    %258 = vector.shape_cast %257 : vector<1x1x128xf32> to vector<128xf32>
    %259 = vector.shape_cast %258 : vector<128xf32> to vector<1x128xf32>
    %260 = vector.broadcast %259 : vector<1x128xf32> to vector<16x128xf32>
    %261 = arith.addf %256, %260 : vector<16x128xf32>
    %cst_162 = arith.constant 0.000000e+00 : f32
    %262 = vector.broadcast %cst_162 : f32 to vector<16x128xf32>
    %263 = arith.maximumf %261, %262 : vector<16x128xf32>
    %264 = arith.truncf %263 : vector<16x128xf32> to vector<16x128xbf16>
    %c0_163 = arith.constant 0 : index
    %c0_164 = arith.constant 0 : index
    %c0_165 = arith.constant 0 : index
    %265 = vector.load %arg12[%c0_163, %c0_164, %c0_165] : memref<1x128x32xbf16, #tpu.memory_space<vmem>>, vector<1x128x32xbf16>
    %266 = vector.shape_cast %265 : vector<1x128x32xbf16> to vector<128x32xbf16>
    %cst_166 = arith.constant dense<0.000000e+00> : vector<16x32xf32>
    %267 = tpu.matmul %264, %266, %cst_166 {dimension_numbers = #tpu.dot_dimension_numbers<[1], [0], [0], [1], [0, 0, 1, 1], [], []>} : vector<16x128xbf16>, vector<128x32xbf16>, vector<16x32xf32> -> vector<16x32xf32>
    %c0_167 = arith.constant 0 : index
    %c0_168 = arith.constant 0 : index
    %c0_169 = arith.constant 0 : index
    %268 = vector.load %arg13[%c0_167, %c0_168, %c0_169] : memref<1x1x32xf32, #tpu.memory_space<vmem>>, vector<1x1x32xf32>
    %269 = vector.shape_cast %268 : vector<1x1x32xf32> to vector<32xf32>
    %270 = vector.shape_cast %269 : vector<32xf32> to vector<1x32xf32>
    %271 = vector.broadcast %270 : vector<1x32xf32> to vector<16x32xf32>
    %272 = arith.addf %267, %271 : vector<16x32xf32>
    %273 = arith.addf %252, %272 : vector<16x32xf32>
    %cst_170 = arith.constant dense<0.000000e+00> : vector<16xf32>
    %274 = vector.multi_reduction <add>, %273, %cst_170 [1] : vector<16x32xf32> to vector<16xf32>
    %275 = vector.shape_cast %274 : vector<16xf32> to vector<16x1xf32>
    %cst_171 = arith.constant 3.200000e+01 : f32
    %276 = vector.broadcast %cst_171 : f32 to vector<16x1xf32>
    %277 = arith.divf %275, %276 : vector<16x1xf32>
    %278 = vector.broadcast %277 : vector<16x1xf32> to vector<16x32xf32>
    %279 = arith.subf %273, %278 : vector<16x32xf32>
    %280 = arith.mulf %279, %279 : vector<16x32xf32>
    %cst_172 = arith.constant dense<0.000000e+00> : vector<16xf32>
    %281 = vector.multi_reduction <add>, %280, %cst_172 [1] : vector<16x32xf32> to vector<16xf32>
    %282 = vector.shape_cast %281 : vector<16xf32> to vector<16x1xf32>
    %cst_173 = arith.constant 3.200000e+01 : f32
    %283 = vector.broadcast %cst_173 : f32 to vector<16x1xf32>
    %284 = arith.divf %282, %283 : vector<16x1xf32>
    %285 = vector.broadcast %277 : vector<16x1xf32> to vector<16x32xf32>
    %286 = arith.subf %273, %285 : vector<16x32xf32>
    %cst_174 = arith.constant 9.99999997E-7 : f32
    %287 = vector.broadcast %cst_174 : f32 to vector<16x1xf32>
    %288 = arith.addf %284, %287 : vector<16x1xf32>
    %289 = math.rsqrt %288 : vector<16x1xf32>
    %290 = vector.broadcast %289 : vector<16x1xf32> to vector<16x32xf32>
    %291 = arith.mulf %286, %290 : vector<16x32xf32>
    %292 = vector.shape_cast %7 : vector<32xf32> to vector<1x32xf32>
    %293 = vector.broadcast %292 : vector<1x32xf32> to vector<16x32xf32>
    %294 = arith.mulf %291, %293 : vector<16x32xf32>
    %295 = vector.shape_cast %9 : vector<32xf32> to vector<1x32xf32>
    %296 = vector.broadcast %295 : vector<1x32xf32> to vector<16x32xf32>
    %297 = arith.addf %294, %296 : vector<16x32xf32>
    %298 = vector.shape_cast %297 : vector<16x32xf32> to vector<2x8x32xf32>
    %c0_175 = arith.constant 0 : index
    %c0_176 = arith.constant 0 : index
    %c0_177 = arith.constant 0 : index
    %299 = vector.load %arg18[%c0_175, %c0_176, %c0_177] : memref<2x8x32xf32, #tpu.memory_space<vmem>>, vector<2x8x32xf32>
    tpu.vector_store %arg18[%c0_175, %c0_176, %c0_177], %298 {strides = array<i32>} : memref<2x8x32xf32, #tpu.memory_space<vmem>>, vector<2x8x32xf32>,
    %c1_i32 = arith.constant 1 : i32
    %300 = arith.cmpi eq, %arg0, %c1_i32 : i32
    %301 = arith.extui %300 : i1 to i32
    %c0_i32_178 = arith.constant 0 : i32
    %302 = arith.cmpi ne, %301, %c0_i32_178 : i32
    scf.if %302 {
      %303 = vector.shape_cast %297 : vector<16x32xf32> to vector<2x8x32xf32>
      %c0_179 = arith.constant 0 : index
      %c0_180 = arith.constant 0 : index
      %c0_181 = arith.constant 0 : index
      %304 = vector.load %arg17[%c0_179, %c0_180, %c0_181] : memref<2x8x32xf32, #tpu.memory_space<vmem>>, vector<2x8x32xf32>
      tpu.vector_store %arg17[%c0_179, %c0_180, %c0_181], %303 {strides = array<i32>} : memref<2x8x32xf32, #tpu.memory_space<vmem>>, vector<2x8x32xf32>,
    } else {
    }
    return
  }
  func.func @transform_0(%arg0: i32) -> (i32, i32, i32) {
    %c0_i32 = arith.constant 0 : i32
    %c0_i32_0 = arith.constant 0 : i32
    %c0_i32_1 = arith.constant 0 : i32
    %c0_i32_2 = arith.constant 0 : i32
    return %c0_i32, %c0_i32_0, %c0_i32_1 : i32, i32, i32
  }
  func.func @transform_1(%arg0: i32) -> (i32, i32, i32, i32) {
    %c0_i32 = arith.constant 0 : i32
    %c0_i32_0 = arith.constant 0 : i32
    %c0_i32_1 = arith.constant 0 : i32
    %c0_i32_2 = arith.constant 0 : i32
    return %arg0, %c0_i32, %c0_i32_0, %c0_i32_1 : i32, i32, i32, i32
  }
  func.func @transform_2(%arg0: i32) -> (i32, i32, i32) {
    %c0_i32 = arith.constant 0 : i32
    %c0_i32_0 = arith.constant 0 : i32
    %c0_i32_1 = arith.constant 0 : i32
    return %arg0, %c0_i32, %c0_i32_0 : i32, i32, i32
  }
  func.func @transform_3(%arg0: i32) -> (i32, i32, i32, i32) {
    %c0_i32 = arith.constant 0 : i32
    %c0_i32_0 = arith.constant 0 : i32
    %c0_i32_1 = arith.constant 0 : i32
    %c0_i32_2 = arith.constant 0 : i32
    return %arg0, %c0_i32, %c0_i32_0, %c0_i32_1 : i32, i32, i32, i32
  }
  func.func @transform_4(%arg0: i32) -> (i32, i32, i32) {
    %c0_i32 = arith.constant 0 : i32
    %c0_i32_0 = arith.constant 0 : i32
    %c0_i32_1 = arith.constant 0 : i32
    return %arg0, %c0_i32, %c0_i32_0 : i32, i32, i32
  }
  func.func @transform_5(%arg0: i32) -> (i32, i32, i32, i32) {
    %c0_i32 = arith.constant 0 : i32
    %c0_i32_0 = arith.constant 0 : i32
    %c0_i32_1 = arith.constant 0 : i32
    %c0_i32_2 = arith.constant 0 : i32
    return %arg0, %c0_i32, %c0_i32_0, %c0_i32_1 : i32, i32, i32, i32
  }
  func.func @transform_6(%arg0: i32) -> (i32, i32, i32) {
    %c0_i32 = arith.constant 0 : i32
    %c0_i32_0 = arith.constant 0 : i32
    %c0_i32_1 = arith.constant 0 : i32
    return %arg0, %c0_i32, %c0_i32_0 : i32, i32, i32
  }
  func.func @transform_7(%arg0: i32) -> (i32, i32, i32, i32) {
    %c0_i32 = arith.constant 0 : i32
    %c0_i32_0 = arith.constant 0 : i32
    %c0_i32_1 = arith.constant 0 : i32
    %c0_i32_2 = arith.constant 0 : i32
    return %arg0, %c0_i32, %c0_i32_0, %c0_i32_1 : i32, i32, i32, i32
  }
  func.func @transform_8(%arg0: i32) -> (i32, i32, i32) {
    %c0_i32 = arith.constant 0 : i32
    %c0_i32_0 = arith.constant 0 : i32
    %c0_i32_1 = arith.constant 0 : i32
    return %arg0, %c0_i32, %c0_i32_0 : i32, i32, i32
  }
  func.func @transform_9(%arg0: i32) -> (i32, i32, i32) {
    %c0_i32 = arith.constant 0 : i32
    %c0_i32_0 = arith.constant 0 : i32
    %c0_i32_1 = arith.constant 0 : i32
    return %arg0, %c0_i32, %c0_i32_0 : i32, i32, i32
  }
  func.func @transform_10(%arg0: i32) -> (i32, i32, i32) {
    %c0_i32 = arith.constant 0 : i32
    %c0_i32_0 = arith.constant 0 : i32
    %c0_i32_1 = arith.constant 0 : i32
    return %arg0, %c0_i32, %c0_i32_0 : i32, i32, i32
  }
  func.func @transform_11(%arg0: i32) -> (i32, i32, i32) {
    %c0_i32 = arith.constant 0 : i32
    %c0_i32_0 = arith.constant 0 : i32
    %c0_i32_1 = arith.constant 0 : i32
    return %arg0, %c0_i32, %c0_i32_0 : i32, i32, i32
  }
  func.func @transform_12(%arg0: i32) -> (i32, i32, i32) {
    %c0_i32 = arith.constant 0 : i32
    %c0_i32_0 = arith.constant 0 : i32
    %c0_i32_1 = arith.constant 0 : i32
    return %arg0, %c0_i32, %c0_i32_0 : i32, i32, i32
  }
  func.func @transform_13(%arg0: i32) -> (i32, i32, i32) {
    %c0_i32 = arith.constant 0 : i32
    %c0_i32_0 = arith.constant 0 : i32
    %c0_i32_1 = arith.constant 0 : i32
    return %arg0, %c0_i32, %c0_i32_0 : i32, i32, i32
  }
  func.func @transform_14(%arg0: i32) -> (i32, i32, i32) {
    %c0_i32 = arith.constant 0 : i32
    %c0_i32_0 = arith.constant 0 : i32
    %c0_i32_1 = arith.constant 0 : i32
    return %arg0, %c0_i32, %c0_i32_0 : i32, i32, i32
  }
  func.func @transform_15(%arg0: i32) -> (i32, i32, i32, i32, i32) {
    %c0_i32 = arith.constant 0 : i32
    %c0_i32_0 = arith.constant 0 : i32
    %c0_i32_1 = arith.constant 0 : i32
    %c0_i32_2 = arith.constant 0 : i32
    %c0_i32_3 = arith.constant 0 : i32
    return %arg0, %c0_i32, %c0_i32_0, %c0_i32_1, %c0_i32_2 : i32, i32, i32, i32, i32
  }
  func.func @transform_16(%arg0: i32) -> (i32, i32, i32) {
    %c0_i32 = arith.constant 0 : i32
    %c0_i32_0 = arith.constant 0 : i32
    %c0_i32_1 = arith.constant 0 : i32
    %c0_i32_2 = arith.constant 0 : i32
    return %c0_i32, %c0_i32_0, %c0_i32_1 : i32, i32, i32
  }
}

</mosaic_0001>

<llo_original>
// kernel: tpu_custom_call.1
$region0: #{tpu_custom_call.1}
  #allocation0 [shape = 'u32[]', space=smem, size = 0x4, offset = 0x4, fixed_abs, tag = 'smem constant byte address 0x4 - core index']
  #allocation1 [shape = 'u32[72,128]{1,0:T(1,128)}', space=vmem, size = 0x9000, scoped, tag = 'internal scratch']
  #allocation2 [shape = 'f32[2,8,32]{2,1,0:T(8,128)}', space=vmem, size = 0x2000, scoped, tag = 'scratch operand']
  %s0 = inlined_call_operand.vmem [shape: f32[2,8,32], index: 0, kind: input, shape index: {}]
  %s1 = inlined_call_operand.vmem [shape: bf16[2,4,32,8], index: 1, kind: input, shape index: {}]
  %s2 = inlined_call_operand.vmem [shape: f32[2,4,8], index: 2, kind: input, shape index: {}]
  %s3 = inlined_call_operand.vmem [shape: bf16[2,4,32,8], index: 3, kind: input, shape index: {}]
  %s4 = inlined_call_operand.vmem [shape: f32[2,4,8], index: 4, kind: input, shape index: {}]
  %s5 = inlined_call_operand.vmem [shape: bf16[2,4,32,8], index: 5, kind: input, shape index: {}]
  %s6 = inlined_call_operand.vmem [shape: f32[2,4,8], index: 6, kind: input, shape index: {}]
  %s7 = inlined_call_operand.vmem [shape: bf16[2,4,8,32], index: 7, kind: input, shape index: {}]
  %s8 = inlined_call_operand.vmem [shape: f32[2,1,32], index: 8, kind: input, shape index: {}]
  %s9 = inlined_call_operand.vmem [shape: bf16[2,32,128], index: 9, kind: input, shape index: {}]
  %s10 = inlined_call_operand.vmem [shape: f32[2,1,128], index: 10, kind: input, shape index: {}]
  %s11 = inlined_call_operand.vmem [shape: bf16[2,128,32], index: 11, kind: input, shape index: {}]
  %s12 = inlined_call_operand.vmem [shape: f32[2,1,32], index: 12, kind: input, shape index: {}]
  %s13 = inlined_call_operand.vmem [shape: f32[2,1,32], index: 13, kind: input, shape index: {}]
  %s14 = inlined_call_operand.vmem [shape: f32[2,1,32], index: 14, kind: input, shape index: {}]
  %s15 = inlined_call_operand.hbm [shape: f32[2,2,4,8,8], index: 15, kind: output, shape index: {0}]
  %s16 = inlined_call_operand.hbm [shape: f32[2,8,32], index: 16, kind: output, shape index: {1}]
  %17 = xla_tuple %s15, %s16
  %s18 = sld [smem:[#allocation0]]
  $region109: #{tpu_custom_call.1} parent=0
    _
  %s20 = ssub.s32 1, %s18
  %s21 = scalar_select 0, %s20, %s18
  $region1: #{tpu_custom_call.1} parent=0
    #allocation3 [shape = 'u8[65536]{0}', space=vmem, size = 0x10000, scoped, tag = 'output window, operand 0']
    #allocation4 [shape = 's32[2]{0}', space=sflag, size = 0x8, scoped, tag = 'scoped memory for tpu_custom_call.1']
    #allocation5 [shape = 'u8[8192]{0}', space=vmem, size = 0x2000, scoped, tag = 'output window, operand 1, single buffered']
    #allocation6 [shape = 's32[1]{0}', space=sflag, size = 0x4, scoped, tag = 'scoped memory for tpu_custom_call.1']
    %22 = vsyncpa [#allocation4], 0
    %s23 = scalar_lea.sflag [#allocation4], 1
    %24 = vsyncpa %s23, 0
    %25 = vsyncpa [#allocation6], 0
    loop: start=0, step=1, limit=4
    $region2: #{tpu_custom_call.1} parent=1 // loop_pre_header
      _
    $region3: #{tpu_custom_call.1} parent=1 // loop_header
      %s27 = sphi 0, %s31
      %p28 = scmp.ge.s32.totalorder %s27, 4
      %s35 = sphi 0, %s35
      %s37 = sphi 0, %s35
      %s38 = sphi 0, %s37
      %s52 = sphi 0, %s38
      %s58 = sphi 0, %s60
      %s61 = sphi 0, %s58
      %s62 = sphi 0, %s61
      %s78 = sphi 0, %s62
      %s84 = sphi 0, %s86
      %s87 = sphi 0, %s84
      %s88 = sphi 0, %s87
      %s104 = sphi 0, %s88
      %s110 = sphi 0, %s112
      %s113 = sphi 0, %s110
      %s114 = sphi 0, %s113
      %s130 = sphi 0, %s114
      %s136 = sphi 0, %s138
      %s139 = sphi 0, %s136
      %s140 = sphi 0, %s139
      %s156 = sphi 0, %s140
      %s162 = sphi 0, %s164
      %s165 = sphi 0, %s162
      %s166 = sphi 0, %s165
      %s182 = sphi 0, %s166
      %s188 = sphi 0, %s190
      %s191 = sphi 0, %s188
      %s192 = sphi 0, %s191
      %s208 = sphi 0, %s192
      %s214 = sphi 0, %s216
      %s217 = sphi 0, %s214
      %s218 = sphi 0, %s217
      %s234 = sphi 0, %s218
      %s240 = sphi 0, %s242
      %s243 = sphi 0, %s240
      %s244 = sphi 0, %s243
      %s260 = sphi 0, %s244
      %s266 = sphi 0, %s268
      %s269 = sphi 0, %s266
      %s270 = sphi 0, %s269
      %s286 = sphi 0, %s270
      %s292 = sphi 0, %s294
      %s295 = sphi 0, %s292
      %s296 = sphi 0, %s295
      %s312 = sphi 0, %s296
      %s318 = sphi 0, %s320
      %s321 = sphi 0, %s318
      %s322 = sphi 0, %s321
      %s338 = sphi 0, %s322
      %s344 = sphi 0, %s346
      %s347 = sphi 0, %s344
      %s348 = sphi 0, %s347
      %s364 = sphi 0, %s348
      %s370 = sphi 0, %s372
      %s373 = sphi 0, %s370
      %s374 = sphi 0, %s373
      %s390 = sphi 0, %s374
      %s396 = sphi 0, %s398
      %s399 = sphi 0, %s396
      %s400 = sphi 0, %s399
      %s416 = sphi 0, %s400
      %s422 = sphi 0, %s424
      %s425 = sphi 0, %s422
      %s426 = sphi 0, %s425
      %s442 = sphi 0, %s426
      %s446 = sphi 0, %s446
      %s448 = sphi 0, %s446
      %s449 = sphi 0, %s448
      %s463 = sphi 0, %s449
    $region4: #{tpu_custom_call.1} parent=1 // loop_header_branch
      %30 = sbr.rel (%p28) target = $region8
    $region5: #{tpu_custom_call.1} parent=1 // loop_body
      %s32 = ssub.s32 %s27, 1
      %s33 = ssub.s32 %s27, 2
      %s34 = sadd.s32 %s27, 1
      %s36 = sadd.s32 %s35, 1
      %p39 = scmp.eq.s32.totalorder %s27, 1
      %p40 = scmp.ne.s32.totalorder %s35, %s37
      %p41 = scmp.eq.s32.totalorder %s27, 0
      %p42 = por %p40, %p41
      %p43 = scmp.ne.s32.totalorder %s35, %s37
      %p44 = scmp.eq.s32.totalorder %s32, 1
      %p45 = por %p43, %p44
      %p46 = scmp.ne.s32.totalorder %s37, %s38
      %p47 = scmp.eq.s32.totalorder %s32, 0
      %p48 = por %p46, %p47
      %p49 = scmp.ne.s32.totalorder %s37, %s38
      %p50 = scmp.eq.s32.totalorder %s33, 1
      %p51 = por %p49, %p50
      %p53 = scmp.ne.s32.totalorder %s38, %s52
      %p54 = scmp.eq.s32.totalorder %s33, 0
      %p55 = por %p53, %p54
      %s56 = ssub.s32 %s27, %s34
      %p57 = scmp.eq.s32.totalorder %s56, 0
      %s59 = sadd.s32 %s58, 1
      %s60 = scalar_select %p57, %s58, %s59
      %p63 = pneg %p57
      %p64 = scmp.eq.s32.totalorder %s27, 1
      %p65 = por %p63, %p64
      %p66 = scmp.ne.s32.totalorder %s58, %s61
      %p67 = scmp.eq.s32.totalorder %s27, 0
      %p68 = por %p66, %p67
      %p69 = scmp.ne.s32.totalorder %s58, %s61
      %p70 = scmp.eq.s32.totalorder %s32, 1
      %p71 = por %p69, %p70
      %p72 = scmp.ne.s32.totalorder %s61, %s62
      %p73 = scmp.eq.s32.totalorder %s32, 0
      %p74 = por %p72, %p73
      %p75 = scmp.ne.s32.totalorder %s61, %s62
      %p76 = scmp.eq.s32.totalorder %s33, 1
      %p77 = por %p75, %p76
      %p79 = scmp.ne.s32.totalorder %s62, %s78
      %p80 = scmp.eq.s32.totalorder %s33, 0
      %p81 = por %p79, %p80
      %s82 = ssub.s32 %s27, %s34
      %p83 = scmp.eq.s32.totalorder %s82, 0
      %s85 = sadd.s32 %s84, 1
      %s86 = scalar_select %p83, %s84, %s85
      %p89 = pneg %p83
      %p90 = scmp.eq.s32.totalorder %s27, 1
      %p91 = por %p89, %p90
      %p92 = scmp.ne.s32.totalorder %s84, %s87
      %p93 = scmp.eq.s32.totalorder %s27, 0
      %p94 = por %p92, %p93
      %p95 = scmp.ne.s32.totalorder %s84, %s87
      %p96 = scmp.eq.s32.totalorder %s32, 1
      %p97 = por %p95, %p96
      %p98 = scmp.ne.s32.totalorder %s87, %s88
      %p99 = scmp.eq.s32.totalorder %s32, 0
      %p100 = por %p98, %p99
      %p101 = scmp.ne.s32.totalorder %s87, %s88
      %p102 = scmp.eq.s32.totalorder %s33, 1
      %p103 = por %p101, %p102
      %p105 = scmp.ne.s32.totalorder %s88, %s104
      %p106 = scmp.eq.s32.totalorder %s33, 0
      %p107 = por %p105, %p106
      %s108 = ssub.s32 %s27, %s34
      %p109 = scmp.eq.s32.totalorder %s108, 0
      %s111 = sadd.s32 %s110, 1
      %s112 = scalar_select %p109, %s110, %s111
      %p115 = pneg %p109
      %p116 = scmp.eq.s32.totalorder %s27, 1
      %p117 = por %p115, %p116
      %p118 = scmp.ne.s32.totalorder %s110, %s113
      %p119 = scmp.eq.s32.totalorder %s27, 0
      %p120 = por %p118, %p119
      %p121 = scmp.ne.s32.totalorder %s110, %s113
      %p122 = scmp.eq.s32.totalorder %s32, 1
      %p123 = por %p121, %p122
      %p124 = scmp.ne.s32.totalorder %s113, %s114
      %p125 = scmp.eq.s32.totalorder %s32, 0
      %p126 = por %p124, %p125
      %p127 = scmp.ne.s32.totalorder %s113, %s114
      %p128 = scmp.eq.s32.totalorder %s33, 1
      %p129 = por %p127, %p128
      %p131 = scmp.ne.s32.totalorder %s114, %s130
      %p132 = scmp.eq.s32.totalorder %s33, 0
      %p133 = por %p131, %p132
      %s134 = ssub.s32 %s27, %s34
      %p135 = scmp.eq.s32.totalorder %s134, 0
      %s137 = sadd.s32 %s136, 1
      %s138 = scalar_select %p135, %s136, %s137
      %p141 = pneg %p135
      %p142 = scmp.eq.s32.totalorder %s27, 1
      %p143 = por %p141, %p142
      %p144 = scmp.ne.s32.totalorder %s136, %s139
      %p145 = scmp.eq.s32.totalorder %s27, 0
      %p146 = por %p144, %p145
      %p147 = scmp.ne.s32.totalorder %s136, %s139
      %p148 = scmp.eq.s32.totalorder %s32, 1
      %p149 = por %p147, %p148
      %p150 = scmp.ne.s32.totalorder %s139, %s140
      %p151 = scmp.eq.s32.totalorder %s32, 0
      %p152 = por %p150, %p151
      %p153 = scmp.ne.s32.totalorder %s139, %s140
      %p154 = scmp.eq.s32.totalorder %s33, 1
      %p155 = por %p153, %p154
      %p157 = scmp.ne.s32.totalorder %s140, %s156
      %p158 = scmp.eq.s32.totalorder %s33, 0
      %p159 = por %p157, %p158
      %s160 = ssub.s32 %s27, %s34
      %p161 = scmp.eq.s32.totalorder %s160, 0
      %s163 = sadd.s32 %s162, 1
      %s164 = scalar_select %p161, %s162, %s163
      %p167 = pneg %p161
      %p168 = scmp.eq.s32.totalorder %s27, 1
      %p169 = por %p167, %p168
      %p170 = scmp.ne.s32.totalorder %s162, %s165
      %p171 = scmp.eq.s32.totalorder %s27, 0
      %p172 = por %p170, %p171
      %p173 = scmp.ne.s32.totalorder %s162, %s165
      %p174 = scmp.eq.s32.totalorder %s32, 1
      %p175 = por %p173, %p174
      %p176 = scmp.ne.s32.totalorder %s165, %s166
      %p177 = scmp.eq.s32.totalorder %s32, 0
      %p178 = por %p176, %p177
      %p179 = scmp.ne.s32.totalorder %s165, %s166
      %p180 = scmp.eq.s32.totalorder %s33, 1
      %p181 = por %p179, %p180
      %p183 = scmp.ne.s32.totalorder %s166, %s182
      %p184 = scmp.eq.s32.totalorder %s33, 0
      %p185 = por %p183, %p184
      %s186 = ssub.s32 %s27, %s34
      %p187 = scmp.eq.s32.totalorder %s186, 0
      %s189 = sadd.s32 %s188, 1
      %s190 = scalar_select %p187, %s188, %s189
      %p193 = pneg %p187
      %p194 = scmp.eq.s32.totalorder %s27, 1
      %p195 = por %p193, %p194
      %p196 = scmp.ne.s32.totalorder %s188, %s191
      %p197 = scmp.eq.s32.totalorder %s27, 0
      %p198 = por %p196, %p197
      %p199 = scmp.ne.s32.totalorder %s188, %s191
      %p200 = scmp.eq.s32.totalorder %s32, 1
      %p201 = por %p199, %p200
      %p202 = scmp.ne.s32.totalorder %s191, %s192
      %p203 = scmp.eq.s32.totalorder %s32, 0
      %p204 = por %p202, %p203
      %p205 = scmp.ne.s32.totalorder %s191, %s192
      %p206 = scmp.eq.s32.totalorder %s33, 1
      %p207 = por %p205, %p206
      %p209 = scmp.ne.s32.totalorder %s192, %s208
      %p210 = scmp.eq.s32.totalorder %s33, 0
      %p211 = por %p209, %p210
      %s212 = ssub.s32 %s27, %s34
      %p213 = scmp.eq.s32.totalorder %s212, 0
      %s215 = sadd.s32 %s214, 1
      %s216 = scalar_select %p213, %s214, %s215
      %p219 = pneg %p213
      %p220 = scmp.eq.s32.totalorder %s27, 1
      %p221 = por %p219, %p220
      %p222 = scmp.ne.s32.totalorder %s214, %s217
      %p223 = scmp.eq.s32.totalorder %s27, 0
      %p224 = por %p222, %p223
      %p225 = scmp.ne.s32.totalorder %s214, %s217
      %p226 = scmp.eq.s32.totalorder %s32, 1
      %p227 = por %p225, %p226
      %p228 = scmp.ne.s32.totalorder %s217, %s218
      %p229 = scmp.eq.s32.totalorder %s32, 0
      %p230 = por %p228, %p229
      %p231 = scmp.ne.s32.totalorder %s217, %s218
      %p232 = scmp.eq.s32.totalorder %s33, 1
      %p233 = por %p231, %p232
      %p235 = scmp.ne.s32.totalorder %s218, %s234
      %p236 = scmp.eq.s32.totalorder %s33, 0
      %p237 = por %p235, %p236
      %s238 = ssub.s32 %s27, %s34
      %p239 = scmp.eq.s32.totalorder %s238, 0
      %s241 = sadd.s32 %s240, 1
      %s242 = scalar_select %p239, %s240, %s241
      %p245 = pneg %p239
      %p246 = scmp.eq.s32.totalorder %s27, 1
      %p247 = por %p245, %p246
      %p248 = scmp.ne.s32.totalorder %s240, %s243
      %p249 = scmp.eq.s32.totalorder %s27, 0
      %p250 = por %p248, %p249
      %p251 = scmp.ne.s32.totalorder %s240, %s243
      %p252 = scmp.eq.s32.totalorder %s32, 1
      %p253 = por %p251, %p252
      %p254 = scmp.ne.s32.totalorder %s243, %s244
      %p255 = scmp.eq.s32.totalorder %s32, 0
      %p256 = por %p254, %p255
      %p257 = scmp.ne.s32.totalorder %s243, %s244
      %p258 = scmp.eq.s32.totalorder %s33, 1
      %p259 = por %p257, %p258
      %p261 = scmp.ne.s32.totalorder %s244, %s260
      %p262 = scmp.eq.s32.totalorder %s33, 0
      %p263 = por %p261, %p262
      %s264 = ssub.s32 %s27, %s34
      %p265 = scmp.eq.s32.totalorder %s264, 0
      %s267 = sadd.s32 %s266, 1
      %s268 = scalar_select %p265, %s266, %s267
      %p271 = pneg %p265
      %p272 = scmp.eq.s32.totalorder %s27, 1
      %p273 = por %p271, %p272
      %p274 = scmp.ne.s32.totalorder %s266, %s269
      %p275 = scmp.eq.s32.totalorder %s27, 0
      %p276 = por %p274, %p275
      %p277 = scmp.ne.s32.totalorder %s266, %s269
      %p278 = scmp.eq.s32.totalorder %s32, 1
      %p279 = por %p277, %p278
      %p280 = scmp.ne.s32.totalorder %s269, %s270
      %p281 = scmp.eq.s32.totalorder %s32, 0
      %p282 = por %p280, %p281
      %p283 = scmp.ne.s32.totalorder %s269, %s270
      %p284 = scmp.eq.s32.totalorder %s33, 1
      %p285 = por %p283, %p284
      %p287 = scmp.ne.s32.totalorder %s270, %s286
      %p288 = scmp.eq.s32.totalorder %s33, 0
      %p289 = por %p287, %p288
      %s290 = ssub.s32 %s27, %s34
      %p291 = scmp.eq.s32.totalorder %s290, 0
      %s293 = sadd.s32 %s292, 1
      %s294 = scalar_select %p291, %s292, %s293
      %p297 = pneg %p291
      %p298 = scmp.eq.s32.totalorder %s27, 1
      %p299 = por %p297, %p298
      %p300 = scmp.ne.s32.totalorder %s292, %s295
      %p301 = scmp.eq.s32.totalorder %s27, 0
      %p302 = por %p300, %p301
      %p303 = scmp.ne.s32.totalorder %s292, %s295
      %p304 = scmp.eq.s32.totalorder %s32, 1
      %p305 = por %p303, %p304
      %p306 = scmp.ne.s32.totalorder %s295, %s296
      %p307 = scmp.eq.s32.totalorder %s32, 0
      %p308 = por %p306, %p307
      %p309 = scmp.ne.s32.totalorder %s295, %s296
      %p310 = scmp.eq.s32.totalorder %s33, 1
      %p311 = por %p309, %p310
      %p313 = scmp.ne.s32.totalorder %s296, %s312
      %p314 = scmp.eq.s32.totalorder %s33, 0
      %p315 = por %p313, %p314
      %s316 = ssub.s32 %s27, %s34
      %p317 = scmp.eq.s32.totalorder %s316, 0
      %s319 = sadd.s32 %s318, 1
      %s320 = scalar_select %p317, %s318, %s319
      %p323 = pneg %p317
      %p324 = scmp.eq.s32.totalorder %s27, 1
      %p325 = por %p323, %p324
      %p326 = scmp.ne.s32.totalorder %s318, %s321
      %p327 = scmp.eq.s32.totalorder %s27, 0
      %p328 = por %p326, %p327
      %p329 = scmp.ne.s32.totalorder %s318, %s321
      %p330 = scmp.eq.s32.totalorder %s32, 1
      %p331 = por %p329, %p330
      %p332 = scmp.ne.s32.totalorder %s321, %s322
      %p333 = scmp.eq.s32.totalorder %s32, 0
      %p334 = por %p332, %p333
      %p335 = scmp.ne.s32.totalorder %s321, %s322
      %p336 = scmp.eq.s32.totalorder %s33, 1
      %p337 = por %p335, %p336
      %p339 = scmp.ne.s32.totalorder %s322, %s338
      %p340 = scmp.eq.s32.totalorder %s33, 0
      %p341 = por %p339, %p340
      %s342 = ssub.s32 %s27, %s34
      %p343 = scmp.eq.s32.totalorder %s342, 0
      %s345 = sadd.s32 %s344, 1
      %s346 = scalar_select %p343, %s344, %s345
      %p349 = pneg %p343
      %p350 = scmp.eq.s32.totalorder %s27, 1
      %p351 = por %p349, %p350
      %p352 = scmp.ne.s32.totalorder %s344, %s347
      %p353 = scmp.eq.s32.totalorder %s27, 0
      %p354 = por %p352, %p353
      %p355 = scmp.ne.s32.totalorder %s344, %s347
      %p356 = scmp.eq.s32.totalorder %s32, 1
      %p357 = por %p355, %p356
      %p358 = scmp.ne.s32.totalorder %s347, %s348
      %p359 = scmp.eq.s32.totalorder %s32, 0
      %p360 = por %p358, %p359
      %p361 = scmp.ne.s32.totalorder %s347, %s348
      %p362 = scmp.eq.s32.totalorder %s33, 1
      %p363 = por %p361, %p362
      %p365 = scmp.ne.s32.totalorder %s348, %s364
      %p366 = scmp.eq.s32.totalorder %s33, 0
      %p367 = por %p365, %p366
      %s368 = ssub.s32 %s27, %s34
      %p369 = scmp.eq.s32.totalorder %s368, 0
      %s371 = sadd.s32 %s370, 1
      %s372 = scalar_select %p369, %s370, %s371
      %p375 = pneg %p369
      %p376 = scmp.eq.s32.totalorder %s27, 1
      %p377 = por %p375, %p376
      %p378 = scmp.ne.s32.totalorder %s370, %s373
      %p379 = scmp.eq.s32.totalorder %s27, 0
      %p380 = por %p378, %p379
      %p381 = scmp.ne.s32.totalorder %s370, %s373
      %p382 = scmp.eq.s32.totalorder %s32, 1
      %p383 = por %p381, %p382
      %p384 = scmp.ne.s32.totalorder %s373, %s374
      %p385 = scmp.eq.s32.totalorder %s32, 0
      %p386 = por %p384, %p385
      %p387 = scmp.ne.s32.totalorder %s373, %s374
      %p388 = scmp.eq.s32.totalorder %s33, 1
      %p389 = por %p387, %p388
      %p391 = scmp.ne.s32.totalorder %s374, %s390
      %p392 = scmp.eq.s32.totalorder %s33, 0
      %p393 = por %p391, %p392
      %s394 = ssub.s32 %s27, %s34
      %p395 = scmp.eq.s32.totalorder %s394, 0
      %s397 = sadd.s32 %s396, 1
      %s398 = scalar_select %p395, %s396, %s397
      %p401 = pneg %p395
      %p402 = scmp.eq.s32.totalorder %s27, 1
      %p403 = por %p401, %p402
      %p404 = scmp.ne.s32.totalorder %s396, %s399
      %p405 = scmp.eq.s32.totalorder %s27, 0
      %p406 = por %p404, %p405
      %p407 = scmp.ne.s32.totalorder %s396, %s399
      %p408 = scmp.eq.s32.totalorder %s32, 1
      %p409 = por %p407, %p408
      %p410 = scmp.ne.s32.totalorder %s399, %s400
      %p411 = scmp.eq.s32.totalorder %s32, 0
      %p412 = por %p410, %p411
      %p413 = scmp.ne.s32.totalorder %s399, %s400
      %p414 = scmp.eq.s32.totalorder %s33, 1
      %p415 = por %p413, %p414
      %p417 = scmp.ne.s32.totalorder %s400, %s416
      %p418 = scmp.eq.s32.totalorder %s33, 0
      %p419 = por %p417, %p418
      %s420 = ssub.s32 %s27, %s34
      %p421 = scmp.eq.s32.totalorder %s420, 0
      %s423 = sadd.s32 %s422, 1
      %s424 = scalar_select %p421, %s422, %s423
      %p427 = pneg %p421
      %p428 = scmp.eq.s32.totalorder %s27, 1
      %p429 = por %p427, %p428
      %p430 = scmp.ne.s32.totalorder %s422, %s425
      %p431 = scmp.eq.s32.totalorder %s27, 0
      %p432 = por %p430, %p431
      %p433 = scmp.ne.s32.totalorder %s422, %s425
      %p434 = scmp.eq.s32.totalorder %s32, 1
      %p435 = por %p433, %p434
      %p436 = scmp.ne.s32.totalorder %s425, %s426
      %p437 = scmp.eq.s32.totalorder %s32, 0
      %p438 = por %p436, %p437
      %p439 = scmp.ne.s32.totalorder %s425, %s426
      %p440 = scmp.eq.s32.totalorder %s33, 1
      %p441 = por %p439, %p440
      %p443 = scmp.ne.s32.totalorder %s426, %s442
      %p444 = scmp.eq.s32.totalorder %s33, 0
      %p445 = por %p443, %p444
      %s447 = sadd.s32 %s446, 1
      %p450 = scmp.eq.s32.totalorder %s27, 1
      %p451 = scmp.ne.s32.totalorder %s446, %s448
      %p452 = scmp.eq.s32.totalorder %s27, 0
      %p453 = por %p451, %p452
      %p454 = scmp.ne.s32.totalorder %s446, %s448
      %p455 = scmp.eq.s32.totalorder %s32, 1
      %p456 = por %p454, %p455
      %p457 = scmp.ne.s32.totalorder %s448, %s449
      %p458 = scmp.eq.s32.totalorder %s32, 0
      %p459 = por %p457, %p458
      %p460 = scmp.ne.s32.totalorder %s448, %s449
      %p461 = scmp.eq.s32.totalorder %s33, 1
      %p462 = por %p460, %p461
      %p464 = scmp.ne.s32.totalorder %s449, %s463
      %p465 = scmp.eq.s32.totalorder %s33, 0
      %p466 = por %p464, %p465
      %p467 = scmp.le.s32.totalorder 1, %s27
      %p468 = scmp.lt.s32.totalorder %s27, 3
      %p469 = pnand %p467, %p468
      %p470 = pneg %p469
      // Predicated region
      $region9: #{tpu_custom_call.1} parent=5 // pred_check
        _
      $region10: #{tpu_custom_call.1} parent=5 // pred_check_branch
        %472 = sbr.rel (%p469) target = $region12
      $region11: #{tpu_custom_call.1} parent=5 // pred_region
        %s473 = ssub.s32 %s27, 1
        // Predicated region
        $region13: #{tpu_custom_call.1} parent=11 // pred_check
          %p474 = pneg %p48
        $region14: #{tpu_custom_call.1} parent=11 // pred_check_branch
          %476 = sbr.rel (%p474) target = $region16
        $region15: #{tpu_custom_call.1} parent=11 // pred_region
          _
        $region16: #{tpu_custom_call.1} parent=11 // pred_fallthru
          _
      $region12: #{tpu_custom_call.1} parent=5 // pred_fallthru
        _
      %p477 = scmp.lt.s32.totalorder %s27, 2
      // Predicated region
      $region17: #{tpu_custom_call.1} parent=5 // pred_check
        %p478 = pneg %p477
      $region18: #{tpu_custom_call.1} parent=5 // pred_check_branch
        %480 = sbr.rel (%p478) target = $region20
      $region19: #{tpu_custom_call.1} parent=5 // pred_region
        // Predicated region
        $region21: #{tpu_custom_call.1} parent=19 // pred_check
          %p481 = pneg %p68
        $region22: #{tpu_custom_call.1} parent=19 // pred_check_branch
          %483 = sbr.rel (%p481) target = $region24
        $region23: #{tpu_custom_call.1} parent=19 // pred_region
          %p484 = scmp.lt.s32.totalorder %s27, 1
          %s485 = scalar_select %p484, %s27, 1
          %s486 = smul.addr %s485, 16
          %s487 = smul.addr %s486, 4
          %s488 = scalar_lea.vmem %s1, %s487
        $region24: #{tpu_custom_call.1} parent=19 // pred_fallthru
          _
        // Predicated region
        $region25: #{tpu_custom_call.1} parent=19 // pred_check
          %p489 = pneg %p94
        $region26: #{tpu_custom_call.1} parent=19 // pred_check_branch
          %491 = sbr.rel (%p489) target = $region28
        $region27: #{tpu_custom_call.1} parent=19 // pred_region
          %p492 = scmp.lt.s32.totalorder %s27, 1
          %s493 = scalar_select %p492, %s27, 1
          %s494 = smul.addr %s493, 4
          %s495 = scalar_lea.vmem %s2, %s494
        $region28: #{tpu_custom_call.1} parent=19 // pred_fallthru
          _
        // Predicated region
        $region29: #{tpu_custom_call.1} parent=19 // pred_check
          %p496 = pneg %p120
        $region30: #{tpu_custom_call.1} parent=19 // pred_check_branch
          %498 = sbr.rel (%p496) target = $region32
        $region31: #{tpu_custom_call.1} parent=19 // pred_region
          %p499 = scmp.lt.s32.totalorder %s27, 1
          %s500 = scalar_select %p499, %s27, 1
          %s501 = smul.addr %s500, 16
          %s502 = smul.addr %s501, 4
          %s503 = scalar_lea.vmem %s3, %s502
        $region32: #{tpu_custom_call.1} parent=19 // pred_fallthru
          _
        // Predicated region
        $region33: #{tpu_custom_call.1} parent=19 // pred_check
          %p504 = pneg %p146
        $region34: #{tpu_custom_call.1} parent=19 // pred_check_branch
          %506 = sbr.rel (%p504) target = $region36
        $region35: #{tpu_custom_call.1} parent=19 // pred_region
          %p507 = scmp.lt.s32.totalorder %s27, 1
          %s508 = scalar_select %p507, %s27, 1
          %s509 = smul.addr %s508, 4
          %s510 = scalar_lea.vmem %s4, %s509
        $region36: #{tpu_custom_call.1} parent=19 // pred_fallthru
          _
        // Predicated region
        $region37: #{tpu_custom_call.1} parent=19 // pred_check
          %p511 = pneg %p172
        $region38: #{tpu_custom_call.1} parent=19 // pred_check_branch
          %513 = sbr.rel (%p511) target = $region40
        $region39: #{tpu_custom_call.1} parent=19 // pred_region
          %p514 = scmp.lt.s32.totalorder %s27, 1
          %s515 = scalar_select %p514, %s27, 1
          %s516 = smul.addr %s515, 16
          %s517 = smul.addr %s516, 4
          %s518 = scalar_lea.vmem %s5, %s517
        $region40: #{tpu_custom_call.1} parent=19 // pred_fallthru
          _
        // Predicated region
        $region41: #{tpu_custom_call.1} parent=19 // pred_check
          %p519 = pneg %p198
        $region42: #{tpu_custom_call.1} parent=19 // pred_check_branch
          %521 = sbr.rel (%p519) target = $region44
        $region43: #{tpu_custom_call.1} parent=19 // pred_region
          %p522 = scmp.lt.s32.totalorder %s27, 1
          %s523 = scalar_select %p522, %s27, 1
          %s524 = smul.addr %s523, 4
          %s525 = scalar_lea.vmem %s6, %s524
        $region44: #{tpu_custom_call.1} parent=19 // pred_fallthru
          _
        // Predicated region
        $region45: #{tpu_custom_call.1} parent=19 // pred_check
          %p526 = pneg %p224
        $region46: #{tpu_custom_call.1} parent=19 // pred_check_branch
          %528 = sbr.rel (%p526) target = $region48
        $region47: #{tpu_custom_call.1} parent=19 // pred_region
          %p529 = scmp.lt.s32.totalorder %s27, 1
          %s530 = scalar_select %p529, %s27, 1
          %s531 = smul.addr %s530, 4
          %s532 = smul.addr %s531, 4
          %s533 = scalar_lea.vmem %s7, %s532
        $region48: #{tpu_custom_call.1} parent=19 // pred_fallthru
          _
        // Predicated region
        $region49: #{tpu_custom_call.1} parent=19 // pred_check
          %p534 = pneg %p250
        $region50: #{tpu_custom_call.1} parent=19 // pred_check_branch
          %536 = sbr.rel (%p534) target = $region52
        $region51: #{tpu_custom_call.1} parent=19 // pred_region
          %p537 = scmp.lt.s32.totalorder %s27, 1
          %s538 = scalar_select %p537, %s27, 1
          %s539 = scalar_lea.vmem %s8, %s538
        $region52: #{tpu_custom_call.1} parent=19 // pred_fallthru
          _
        // Predicated region
        $region53: #{tpu_custom_call.1} parent=19 // pred_check
          %p540 = pneg %p276
        $region54: #{tpu_custom_call.1} parent=19 // pred_check_branch
          %542 = sbr.rel (%p540) target = $region56
        $region55: #{tpu_custom_call.1} parent=19 // pred_region
          %p543 = scmp.lt.s32.totalorder %s27, 1
          %s544 = scalar_select %p543, %s27, 1
          %s545 = smul.addr %s544, 4
          %s546 = smul.addr %s545, 4
          %s547 = scalar_lea.vmem %s9, %s546
        $region56: #{tpu_custom_call.1} parent=19 // pred_fallthru
          _
        // Predicated region
        $region57: #{tpu_custom_call.1} parent=19 // pred_check
          %p548 = pneg %p302
        $region58: #{tpu_custom_call.1} parent=19 // pred_check_branch
          %550 = sbr.rel (%p548) target = $region60
        $region59: #{tpu_custom_call.1} parent=19 // pred_region
          %p551 = scmp.lt.s32.totalorder %s27, 1
          %s552 = scalar_select %p551, %s27, 1
          %s553 = scalar_lea.vmem %s10, %s552
        $region60: #{tpu_custom_call.1} parent=19 // pred_fallthru
          _
        // Predicated region
        $region61: #{tpu_custom_call.1} parent=19 // pred_check
          %p554 = pneg %p328
        $region62: #{tpu_custom_call.1} parent=19 // pred_check_branch
          %556 = sbr.rel (%p554) target = $region64
        $region63: #{tpu_custom_call.1} parent=19 // pred_region
          %p557 = scmp.lt.s32.totalorder %s27, 1
          %s558 = scalar_select %p557, %s27, 1
          %s559 = smul.addr %s558, 16
          %s560 = smul.addr %s559, 4
          %s561 = scalar_lea.vmem %s11, %s560
        $region64: #{tpu_custom_call.1} parent=19 // pred_fallthru
          _
        // Predicated region
        $region65: #{tpu_custom_call.1} parent=19 // pred_check
          %p562 = pneg %p354
        $region66: #{tpu_custom_call.1} parent=19 // pred_check_branch
          %564 = sbr.rel (%p562) target = $region68
        $region67: #{tpu_custom_call.1} parent=19 // pred_region
          %p565 = scmp.lt.s32.totalorder %s27, 1
          %s566 = scalar_select %p565, %s27, 1
          %s567 = scalar_lea.vmem %s12, %s566
        $region68: #{tpu_custom_call.1} parent=19 // pred_fallthru
          _
        // Predicated region
        $region69: #{tpu_custom_call.1} parent=19 // pred_check
          %p568 = pneg %p380
        $region70: #{tpu_custom_call.1} parent=19 // pred_check_branch
          %570 = sbr.rel (%p568) target = $region72
        $region71: #{tpu_custom_call.1} parent=19 // pred_region
          %p571 = scmp.lt.s32.totalorder %s27, 1
          %s572 = scalar_select %p571, %s27, 1
          %s573 = scalar_lea.vmem %s13, %s572
        $region72: #{tpu_custom_call.1} parent=19 // pred_fallthru
          _
        // Predicated region
        $region73: #{tpu_custom_call.1} parent=19 // pred_check
          %p574 = pneg %p406
        $region74: #{tpu_custom_call.1} parent=19 // pred_check_branch
          %576 = sbr.rel (%p574) target = $region76
        $region75: #{tpu_custom_call.1} parent=19 // pred_region
          %p577 = scmp.lt.s32.totalorder %s27, 1
          %s578 = scalar_select %p577, %s27, 1
          %s579 = scalar_lea.vmem %s14, %s578
        $region76: #{tpu_custom_call.1} parent=19 // pred_fallthru
          _
      $region20: #{tpu_custom_call.1} parent=5 // pred_fallthru
        _
      %p580 = scmp.le.s32.totalorder 1, %s27
      %p581 = scmp.lt.s32.totalorder %s27, 3
      %p582 = pnand %p580, %p581
      %p583 = pneg %p582
      // Predicated region
      $region77: #{tpu_custom_call.1} parent=5 // pred_check
        _
      $region78: #{tpu_custom_call.1} parent=5 // pred_check_branch
        %585 = sbr.rel (%p582) target = $region80
      $region79: #{tpu_custom_call.1} parent=5 // pred_region
        %s586 = ssub.s32 %s27, 1
        %p587 = pneg %p48
        %p588 = pneg %p45
        %p589 = scmp.lt.s32.totalorder %s32, 1
        %s590 = scalar_select %p589, %s32, 1
        %s591 = smul.addr %s590, 16
        %s592 = smul.addr %s591, 4
        %s593 = scalar_lea.vmem %s1, %s592
        %p594 = pneg %p74
        %p595 = pneg %p71
        %p596 = scmp.lt.s32.totalorder %s32, 1
        %s597 = scalar_select %p596, %s32, 1
        %s598 = smul.addr %s597, 4
        %s599 = scalar_lea.vmem %s2, %s598
        %p600 = pneg %p100
        %p601 = pneg %p97
        %p602 = scmp.lt.s32.totalorder %s32, 1
        %s603 = scalar_select %p602, %s32, 1
        %s604 = smul.addr %s603, 16
        %s605 = smul.addr %s604, 4
        %s606 = scalar_lea.vmem %s3, %s605
        %p607 = pneg %p126
        %p608 = pneg %p123
        %p609 = scmp.lt.s32.totalorder %s32, 1
        %s610 = scalar_select %p609, %s32, 1
        %s611 = smul.addr %s610, 4
        %s612 = scalar_lea.vmem %s4, %s611
        %p613 = pneg %p152
        %p614 = pneg %p149
        %p615 = scmp.lt.s32.totalorder %s32, 1
        %s616 = scalar_select %p615, %s32, 1
        %s617 = smul.addr %s616, 16
        %s618 = smul.addr %s617, 4
        %s619 = scalar_lea.vmem %s5, %s618
        %p620 = pneg %p178
        %p621 = pneg %p175
        %p622 = scmp.lt.s32.totalorder %s32, 1
        %s623 = scalar_select %p622, %s32, 1
        %s624 = smul.addr %s623, 4
        %s625 = scalar_lea.vmem %s6, %s624
        %p626 = pneg %p204
        %p627 = pneg %p201
        %p628 = scmp.lt.s32.totalorder %s32, 1
        %s629 = scalar_select %p628, %s32, 1
        %s630 = smul.addr %s629, 4
        %s631 = smul.addr %s630, 4
        %s632 = scalar_lea.vmem %s7, %s631
        %p633 = pneg %p230
        %p634 = pneg %p227
        %p635 = scmp.lt.s32.totalorder %s32, 1
        %s636 = scalar_select %p635, %s32, 1
        %s637 = scalar_lea.vmem %s8, %s636
        %p638 = pneg %p256
        %p639 = pneg %p253
        %p640 = scmp.lt.s32.totalorder %s32, 1
        %s641 = scalar_select %p640, %s32, 1
        %s642 = smul.addr %s641, 4
        %s643 = smul.addr %s642, 4
        %s644 = scalar_lea.vmem %s9, %s643
        %p645 = pneg %p282
        %p646 = pneg %p279
        %p647 = scmp.lt.s32.totalorder %s32, 1
        %s648 = scalar_select %p647, %s32, 1
        %s649 = scalar_lea.vmem %s10, %s648
        %p650 = pneg %p308
        %p651 = pneg %p305
        %p652 = scmp.lt.s32.totalorder %s32, 1
        %s653 = scalar_select %p652, %s32, 1
        %s654 = smul.addr %s653, 16
        %s655 = smul.addr %s654, 4
        %s656 = scalar_lea.vmem %s11, %s655
        %p657 = pneg %p334
        %p658 = pneg %p331
        %p659 = scmp.lt.s32.totalorder %s32, 1
        %s660 = scalar_select %p659, %s32, 1
        %s661 = scalar_lea.vmem %s12, %s660
        %p662 = pneg %p360
        %p663 = pneg %p357
        %p664 = scmp.lt.s32.totalorder %s32, 1
        %s665 = scalar_select %p664, %s32, 1
        %s666 = scalar_lea.vmem %s13, %s665
        %p667 = pneg %p386
        %p668 = pneg %p383
        %p669 = scmp.lt.s32.totalorder %s32, 1
        %s670 = scalar_select %p669, %s32, 1
        %s671 = scalar_lea.vmem %s14, %s670
        %p672 = pneg %p412
        %p673 = pneg %p409
        %p674 = pneg %p438
        %p675 = pneg %p435
        %s676 = sand.u32 %s425, 1
        %s677 = scalar_lea.sflag [#allocation4], %s676
        %s678 = sand.u32 %s425, 1
        %s679 = smul.addr %s678, 64
        %s680 = scalar_lea.vmem [#allocation3], %s679
        %p681 = pneg %p459
        %p682 = pneg %p456
        %p683 = scmp.lt.s32.totalorder %s32, 1
        %s684 = scalar_select %p683, %s32, 1
        %s685 = smul.addr %s684, 16
        %s686 = smul.addr %s685, 4
        %s687 = scalar_lea.vmem %s1, %s686
        %p688 = scmp.lt.s32.totalorder %s32, 1
        %s689 = scalar_select %p688, %s32, 1
        %s690 = smul.addr %s689, 4
        %s691 = scalar_lea.vmem %s2, %s690
        %p692 = scmp.lt.s32.totalorder %s32, 1
        %s693 = scalar_select %p692, %s32, 1
        %s694 = smul.addr %s693, 16
        %s695 = smul.addr %s694, 4
        %s696 = scalar_lea.vmem %s3, %s695
        %p697 = scmp.lt.s32.totalorder %s32, 1
        %s698 = scalar_select %p697, %s32, 1
        %s699 = smul.addr %s698, 4
        %s700 = scalar_lea.vmem %s4, %s699
        %p701 = scmp.lt.s32.totalorder %s32, 1
        %s702 = scalar_select %p701, %s32, 1
        %s703 = smul.addr %s702, 16
        %s704 = smul.addr %s703, 4
        %s705 = scalar_lea.vmem %s5, %s704
        %p706 = scmp.lt.s32.totalorder %s32, 1
        %s707 = scalar_select %p706, %s32, 1
        %s708 = smul.addr %s707, 4
        %s709 = scalar_lea.vmem %s6, %s708
        %p710 = scmp.lt.s32.totalorder %s32, 1
        %s711 = scalar_select %p710, %s32, 1
        %s712 = smul.addr %s711, 4
        %s713 = smul.addr %s712, 4
        %s714 = scalar_lea.vmem %s7, %s713
        %p715 = scmp.lt.s32.totalorder %s32, 1
        %s716 = scalar_select %p715, %s32, 1
        %s717 = scalar_lea.vmem %s8, %s716
        %p718 = scmp.lt.s32.totalorder %s32, 1
        %s719 = scalar_select %p718, %s32, 1
        %s720 = smul.addr %s719, 4
        %s721 = smul.addr %s720, 4
        %s722 = scalar_lea.vmem %s9, %s721
        %p723 = scmp.lt.s32.totalorder %s32, 1
        %s724 = scalar_select %p723, %s32, 1
        %s725 = scalar_lea.vmem %s10, %s724
        %p726 = scmp.lt.s32.totalorder %s32, 1
        %s727 = scalar_select %p726, %s32, 1
        %s728 = smul.addr %s727, 16
        %s729 = smul.addr %s728, 4
        %s730 = scalar_lea.vmem %s11, %s729
        %p731 = scmp.lt.s32.totalorder %s32, 1
        %s732 = scalar_select %p731, %s32, 1
        %s733 = scalar_lea.vmem %s12, %s732
        %p734 = scmp.lt.s32.totalorder %s32, 1
        %s735 = scalar_select %p734, %s32, 1
        %s736 = scalar_lea.vmem %s13, %s735
        %p737 = scmp.lt.s32.totalorder %s32, 1
        %s738 = scalar_select %p737, %s32, 1
        %s739 = scalar_lea.vmem %s14, %s738
        %p741 = scmp.eq.s32.totalorder %s32, 0
        // Predicated region
        $region81: #{tpu_custom_call.1} parent=79 // pred_check
          %p742 = pneg %p741
        $region82: #{tpu_custom_call.1} parent=79 // pred_check_branch
          %744 = sbr.rel (%p742) target = $region84
        $region83: #{tpu_custom_call.1} parent=79 // pred_region
          %v745 = vld [vmem:[%s0] sm:$0xff]
          %v746 = vld [vmem:[%s0 + $0x8] sm:$0xff]
          %vm747 = vcmask 261120
          %748 = vst.msk [vmem:[#allocation2] sm:$0xff] %vm747, %v745
          %749 = vst.msk [vmem:[#allocation2 + $0x8] sm:$0xff] %vm747, %v746
        $region84: #{tpu_custom_call.1} parent=79 // pred_fallthru
          _
        %v750 = vld [vmem:[#allocation2] sm:$0xff]
        %v751 = vld [vmem:[#allocation2 + $0x8] sm:$0xff]
        %v752 = vpack.c.bf16 %v751, %v750
        %v753 = vld [vmem:[%s736] sm:$0x1]
        %v754 = vld [vmem:[%s739] sm:$0x1]
        %v755 = vld [vmem:[%s687] sm:$0xf]
        %v756 = vld [vmem:[%s687 + $0x4] sm:$0xf]
        %v757 = vld [vmem:[%s687 + $0x8] sm:$0xf]
        %v758 = vld [vmem:[%s687 + $0xc] sm:$0xf]
        %v759 = vld [vmem:[%s691] sm:$0x1]
        %v760 = vperm.slane %v759, 0
        %v765 = vunpack.c.l.b16 %v755
        %v766 = vunpack.c.l.b16 %v756
        %v767 = vunpack.c.l.b16 %v757
        %v768 = vunpack.c.l.b16 %v758
        %v769 = vpack.c.b16 %v766, %v765
        %v770 = vpack.c.b16 %v768, %v767
        %vm773 = vcmask 261120
        %v775 = vsel %vm773, %v752, 0
        %777 = vmatpush.bf16.msra.mxu0 0
        %778 = vmatpush.bf16.msra.mxu0 0
        %779 = vmatpush.bf16.msra.mxu0 0
        %780 = vmatpush.bf16.msra.mxu0 0
        %781 = vmatpush.bf16.msra.mxu0 0
        %782 = vmatpush.bf16.msra.mxu0 0
        %783 = vmatpush.bf16.msra.mxu0 %v770
        %784 = vmatpush.bf16.msra.mxu0 %v769
        %785 = vmatmul.bf16.gmra.mxu0 %v775
        %v786 = vpop.f32.mrf.mxu0
        %v787 = vadd.f32 %v760, %v786
        %v788 = vpop.f32.mrf.mxu0
        %v789 = vadd.f32 %v760, %v788
        %790 = vdwg.mxu0
        %v791 = vld [vmem:[%s696] sm:$0xf]
        %v792 = vld [vmem:[%s696 + $0x4] sm:$0xf]
        %v793 = vld [vmem:[%s696 + $0x8] sm:$0xf]
        %v794 = vld [vmem:[%s696 + $0xc] sm:$0xf]
        %v795 = vld [vmem:[%s700] sm:$0x1]
        %v796 = vperm.slane %v795, 0
        %v801 = vunpack.c.l.b16 %v791
        %v802 = vunpack.c.l.b16 %v792
        %v803 = vunpack.c.l.b16 %v793
        %v804 = vunpack.c.l.b16 %v794
        %v805 = vpack.c.b16 %v802, %v801
        %v806 = vpack.c.b16 %v804, %v803
        %809 = vmatpush.bf16.msra.mxu0 0
        %810 = vmatpush.bf16.msra.mxu0 0
        %811 = vmatpush.bf16.msra.mxu0 0
        %812 = vmatpush.bf16.msra.mxu0 0
        %813 = vmatpush.bf16.msra.mxu0 0
        %814 = vmatpush.bf16.msra.mxu0 0
        %815 = vmatpush.bf16.msra.mxu0 %v806
        %816 = vmatpush.bf16.msra.mxu0 %v805
        %817 = vmatmul.bf16.gmra.mxu0 %v775
        %v818 = vpop.f32.mrf.mxu0
        %v819 = vadd.f32 %v796, %v818
        %v820 = vpop.f32.mrf.mxu0
        %v821 = vadd.f32 %v796, %v820
        %822 = vdwg.mxu0
        %v823 = vld [vmem:[%s705] sm:$0xf]
        %v824 = vld [vmem:[%s705 + $0x4] sm:$0xf]
        %v825 = vld [vmem:[%s705 + $0x8] sm:$0xf]
        %v826 = vld [vmem:[%s705 + $0xc] sm:$0xf]
        %v827 = vld [vmem:[%s709] sm:$0x1]
        %v828 = vperm.slane %v827, 0
        %v833 = vunpack.c.l.b16 %v823
        %v834 = vunpack.c.l.b16 %v824
        %v835 = vunpack.c.l.b16 %v825
        %v836 = vunpack.c.l.b16 %v826
        %v837 = vpack.c.b16 %v834, %v833
        %v838 = vpack.c.b16 %v836, %v835
        %841 = vmatpush.bf16.msra.mxu0 0
        %842 = vmatpush.bf16.msra.mxu0 0
        %843 = vmatpush.bf16.msra.mxu0 0
        %844 = vmatpush.bf16.msra.mxu0 0
        %845 = vmatpush.bf16.msra.mxu0 0
        %846 = vmatpush.bf16.msra.mxu0 0
        %847 = vmatpush.bf16.msra.mxu0 %v838
        %848 = vmatpush.bf16.msra.mxu0 %v837
        %849 = vmatmul.bf16.gmra.mxu0 %v775
        %v850 = vpop.f32.mrf.mxu0
        %v851 = vadd.f32 %v828, %v850
        %v852 = vpop.f32.mrf.mxu0
        %v853 = vadd.f32 %v828, %v852
        %854 = vdwg.mxu0
        %v855 = vmul.f32 %v787, 0.17677669
        %v856 = vmul.f32 %v789, 0.17677669
        %v857 = vpack.c.bf16 %v855, %v855
        %v858 = vpack.c.bf16 %v856, %v856
        %v859 = vpack.c.bf16 %v819, %v819
        %v860 = vpack.c.bf16 %v821, %v821
        %v861 = vpack.c.bf16 %v851, %v851
        %v862 = vpack.c.bf16 %v853, %v853
        %vm863 = vcmask 64512
        %v865 = vsel %vm863, %v857, 0
        %v868 = vsel %vm863, %v859, 0
        %870 = vmatpush.bf16.xpose.msra.mxu0 0
        %871 = vmatpush.bf16.xpose.msra.mxu0 0
        %872 = vmatpush.bf16.xpose.msra.mxu0 0
        %873 = vmatpush.bf16.xpose.msra.mxu0 0
        %874 = vmatpush.bf16.xpose.msra.mxu0 0
        %875 = vmatpush.bf16.xpose.msra.mxu0 0
        %876 = vmatpush.bf16.xpose.msra.mxu0 0
        %877 = vmatpush.bf16.xpose.msra.mxu0 %v868
        %878 = vmatmul.bf16.gmra.mxu0 %v865
        %v879 = vpop.f32.mrf.mxu0
        %v880 = vadd.f32 0.0, %v879
        %v881 = vpop.f32.mrf.mxu0
        %882 = vdwg.mxu0
        %v884 = vsel %vm863, %v858, 0
        %v887 = vsel %vm863, %v860, 0
        %889 = vmatpush.bf16.xpose.msra.mxu0 0
        %890 = vmatpush.bf16.xpose.msra.mxu0 0
        %891 = vmatpush.bf16.xpose.msra.mxu0 0
        %892 = vmatpush.bf16.xpose.msra.mxu0 0
        %893 = vmatpush.bf16.xpose.msra.mxu0 0
        %894 = vmatpush.bf16.xpose.msra.mxu0 0
        %895 = vmatpush.bf16.xpose.msra.mxu0 0
        %896 = vmatpush.bf16.xpose.msra.mxu0 %v887
        %897 = vmatmul.bf16.gmra.mxu0 %v884
        %v898 = vpop.f32.mrf.mxu0
        %v899 = vadd.f32 0.0, %v898
        %v900 = vpop.f32.mrf.mxu0
        %901 = vdwg.mxu0
        %v902 = vsel %vm863, %v880, -inf
        %903 = vmax.xlane.f32.xlu0 %v902
        %v904 = vpop.xlane.xlu0 %903
        %v905 = vsel %vm863, %v899, -inf
        %906 = vmax.xlane.f32.xlu0 %v905
        %v907 = vpop.xlane.xlu0 %906
        %v908 = vsub.f32 %v880, %v904
        %v909 = vsub.f32 %v899, %v907
        %v910 = vmul.f32 %v908, 1.442695
        %v911 = vpow.pop %v910
        %v912 = vmul.f32 %v909, 1.442695
        %v913 = vpow.pop %v912
        %v914 = vsel %vm863, %v911, 0.0
        %915 = vadd.xlane.f32.xlu0 %v914
        %v916 = vpop.xlane.xlu0 %915
        %v917 = vsel %vm863, %v913, 0.0
        %918 = vadd.xlane.f32.xlu0 %v917
        %v919 = vpop.xlane.xlu0 %918
        %v920 = vrcp.pop %v916
        %v921 = vrcp.pop %v919
        %v922 = vmul.f32 %v911, %v920
        %v923 = vmul.f32 %v913, %v921
        %v924 = vpack.c.bf16 %v922, %v922
        %v925 = vpack.c.bf16 %v923, %v923
        %v927 = vsel %vm863, %v924, 0
        %vm929 = vcmask 1043456
        %v931 = vsel %vm929, %v861, 0
        %933 = vmatpush.bf16.msra.mxu0 0
        %934 = vmatpush.bf16.msra.mxu0 0
        %935 = vmatpush.bf16.msra.mxu0 0
        %936 = vmatpush.bf16.msra.mxu0 0
        %937 = vmatpush.bf16.msra.mxu0 0
        %938 = vmatpush.bf16.msra.mxu0 0
        %939 = vmatpush.bf16.msra.mxu0 0
        %940 = vmatpush.bf16.msra.mxu0 %v931
        %941 = vmatmul.bf16.gmra.mxu0 %v927
        %v942 = vpop.f32.mrf.mxu0
        %v943 = vadd.f32 0.0, %v942
        %v944 = vpop.f32.mrf.mxu0
        %945 = vdwg.mxu0
        %v947 = vsel %vm863, %v925, 0
        %v950 = vsel %vm929, %v862, 0
        %952 = vmatpush.bf16.msra.mxu0 0
        %953 = vmatpush.bf16.msra.mxu0 0
        %954 = vmatpush.bf16.msra.mxu0 0
        %955 = vmatpush.bf16.msra.mxu0 0
        %956 = vmatpush.bf16.msra.mxu0 0
        %957 = vmatpush.bf16.msra.mxu0 0
        %958 = vmatpush.bf16.msra.mxu0 0
        %959 = vmatpush.bf16.msra.mxu0 %v950
        %960 = vmatmul.bf16.gmra.mxu0 %v947
        %v961 = vpop.f32.mrf.mxu0
        %v962 = vadd.f32 0.0, %v961
        %v963 = vpop.f32.mrf.mxu0
        %964 = vdwg.mxu0
        %v965 = vpack.c.bf16 %v962, %v943
        %v966 = vld [vmem:[%s714] sm:$0xf]
        %s967 = scalar_lea.vmem %s687, 16
        %v968 = vld [vmem:[%s967] sm:$0xf]
        %v969 = vld [vmem:[%s967 + $0x4] sm:$0xf]
        %v970 = vld [vmem:[%s967 + $0x8] sm:$0xf]
        %v971 = vld [vmem:[%s967 + $0xc] sm:$0xf]
        %v972 = vld [vmem:[%s691 + $0x1] sm:$0x1]
        %v973 = vperm.slane %v972, 0
        %v978 = vunpack.c.l.b16 %v968
        %v979 = vunpack.c.l.b16 %v969
        %v980 = vunpack.c.l.b16 %v970
        %v981 = vunpack.c.l.b16 %v971
        %v982 = vpack.c.b16 %v979, %v978
        %v983 = vpack.c.b16 %v981, %v980
        %986 = vmatpush.bf16.msra.mxu0 0
        %987 = vmatpush.bf16.msra.mxu0 0
        %988 = vmatpush.bf16.msra.mxu0 0
        %989 = vmatpush.bf16.msra.mxu0 0
        %990 = vmatpush.bf16.msra.mxu0 0
        %991 = vmatpush.bf16.msra.mxu0 0
        %992 = vmatpush.bf16.msra.mxu0 %v983
        %993 = vmatpush.bf16.msra.mxu0 %v982
        %994 = vmatmul.bf16.gmra.mxu0 %v775
        %v995 = vpop.f32.mrf.mxu0
        %v996 = vadd.f32 %v973, %v995
        %v997 = vpop.f32.mrf.mxu0
        %v998 = vadd.f32 %v973, %v997
        %999 = vdwg.mxu0
        %s1000 = scalar_lea.vmem %s696, 16
        %v1001 = vld [vmem:[%s1000] sm:$0xf]
        %v1002 = vld [vmem:[%s1000 + $0x4] sm:$0xf]
        %v1003 = vld [vmem:[%s1000 + $0x8] sm:$0xf]
        %v1004 = vld [vmem:[%s1000 + $0xc] sm:$0xf]
        %v1005 = vld [vmem:[%s700 + $0x1] sm:$0x1]
        %v1006 = vperm.slane %v1005, 0
        %v1011 = vunpack.c.l.b16 %v1001
        %v1012 = vunpack.c.l.b16 %v1002
        %v1013 = vunpack.c.l.b16 %v1003
        %v1014 = vunpack.c.l.b16 %v1004
        %v1015 = vpack.c.b16 %v1012, %v1011
        %v1016 = vpack.c.b16 %v1014, %v1013
        %1019 = vmatpush.bf16.msra.mxu0 0
        %1020 = vmatpush.bf16.msra.mxu0 0
        %1021 = vmatpush.bf16.msra.mxu0 0
        %1022 = vmatpush.bf16.msra.mxu0 0
        %1023 = vmatpush.bf16.msra.mxu0 0
        %1024 = vmatpush.bf16.msra.mxu0 0
        %1025 = vmatpush.bf16.msra.mxu0 %v1016
        %1026 = vmatpush.bf16.msra.mxu0 %v1015
        %1027 = vmatmul.bf16.gmra.mxu0 %v775
        %v1028 = vpop.f32.mrf.mxu0
        %v1029 = vadd.f32 %v1006, %v1028
        %v1030 = vpop.f32.mrf.mxu0
        %v1031 = vadd.f32 %v1006, %v1030
        %1032 = vdwg.mxu0
        %s1033 = scalar_lea.vmem %s705, 16
        %v1034 = vld [vmem:[%s1033] sm:$0xf]
        %v1035 = vld [vmem:[%s1033 + $0x4] sm:$0xf]
        %v1036 = vld [vmem:[%s1033 + $0x8] sm:$0xf]
        %v1037 = vld [vmem:[%s1033 + $0xc] sm:$0xf]
        %v1038 = vld [vmem:[%s709 + $0x1] sm:$0x1]
        %v1039 = vperm.slane %v1038, 0
        %v1044 = vunpack.c.l.b16 %v1034
        %v1045 = vunpack.c.l.b16 %v1035
        %v1046 = vunpack.c.l.b16 %v1036
        %v1047 = vunpack.c.l.b16 %v1037
        %v1048 = vpack.c.b16 %v1045, %v1044
        %v1049 = vpack.c.b16 %v1047, %v1046
        %1052 = vmatpush.bf16.msra.mxu0 0
        %1053 = vmatpush.bf16.msra.mxu0 0
        %1054 = vmatpush.bf16.msra.mxu0 0
        %1055 = vmatpush.bf16.msra.mxu0 0
        %1056 = vmatpush.bf16.msra.mxu0 0
        %1057 = vmatpush.bf16.msra.mxu0 0
        %1058 = vmatpush.bf16.msra.mxu0 %v1049
        %1059 = vmatpush.bf16.msra.mxu0 %v1048
        %1060 = vmatmul.bf16.gmra.mxu0 %v775
        %v1061 = vpop.f32.mrf.mxu0
        %v1062 = vadd.f32 %v1039, %v1061
        %v1063 = vpop.f32.mrf.mxu0
        %v1064 = vadd.f32 %v1039, %v1063
        %1065 = vdwg.mxu0
        %v1066 = vmul.f32 %v996, 0.17677669
        %v1067 = vmul.f32 %v998, 0.17677669
        %v1068 = vpack.c.bf16 %v1066, %v1066
        %v1069 = vpack.c.bf16 %v1067, %v1067
        %v1070 = vpack.c.bf16 %v1029, %v1029
        %v1071 = vpack.c.bf16 %v1031, %v1031
        %v1072 = vpack.c.bf16 %v1062, %v1062
        %v1073 = vpack.c.bf16 %v1064, %v1064
        %v1075 = vsel %vm863, %v1068, 0
        %v1078 = vsel %vm863, %v1070, 0
        %1080 = vmatpush.bf16.xpose.msra.mxu0 0
        %1081 = vmatpush.bf16.xpose.msra.mxu0 0
        %1082 = vmatpush.bf16.xpose.msra.mxu0 0
        %1083 = vmatpush.bf16.xpose.msra.mxu0 0
        %1084 = vmatpush.bf16.xpose.msra.mxu0 0
        %1085 = vmatpush.bf16.xpose.msra.mxu0 0
        %1086 = vmatpush.bf16.xpose.msra.mxu0 0
        %1087 = vmatpush.bf16.xpose.msra.mxu0 %v1078
        %1088 = vmatmul.bf16.gmra.mxu0 %v1075
        %v1089 = vpop.f32.mrf.mxu0
        %v1090 = vadd.f32 0.0, %v1089
        %v1091 = vpop.f32.mrf.mxu0
        %1092 = vdwg.mxu0
        %v1094 = vsel %vm863, %v1069, 0
        %v1097 = vsel %vm863, %v1071, 0
        %1099 = vmatpush.bf16.xpose.msra.mxu0 0
        %1100 = vmatpush.bf16.xpose.msra.mxu0 0
        %1101 = vmatpush.bf16.xpose.msra.mxu0 0
        %1102 = vmatpush.bf16.xpose.msra.mxu0 0
        %1103 = vmatpush.bf16.xpose.msra.mxu0 0
        %1104 = vmatpush.bf16.xpose.msra.mxu0 0
        %1105 = vmatpush.bf16.xpose.msra.mxu0 0
        %1106 = vmatpush.bf16.xpose.msra.mxu0 %v1097
        %1107 = vmatmul.bf16.gmra.mxu0 %v1094
        %v1108 = vpop.f32.mrf.mxu0
        %v1109 = vadd.f32 0.0, %v1108
        %v1110 = vpop.f32.mrf.mxu0
        %1111 = vdwg.mxu0
        %v1112 = vsel %vm863, %v1090, -inf
        %1113 = vmax.xlane.f32.xlu0 %v1112
        %v1114 = vpop.xlane.xlu0 %1113
        %v1115 = vsel %vm863, %v1109, -inf
        %1116 = vmax.xlane.f32.xlu0 %v1115
        %v1117 = vpop.xlane.xlu0 %1116
        %v1118 = vsub.f32 %v1090, %v1114
        %v1119 = vsub.f32 %v1109, %v1117
        %v1120 = vmul.f32 %v1118, 1.442695
        %v1121 = vpow.pop %v1120
        %v1122 = vmul.f32 %v1119, 1.442695
        %v1123 = vpow.pop %v1122
        %v1124 = vsel %vm863, %v1121, 0.0
        %1125 = vadd.xlane.f32.xlu0 %v1124
        %v1126 = vpop.xlane.xlu0 %1125
        %v1127 = vsel %vm863, %v1123, 0.0
        %1128 = vadd.xlane.f32.xlu0 %v1127
        %v1129 = vpop.xlane.xlu0 %1128
        %v1130 = vrcp.pop %v1126
        %v1131 = vrcp.pop %v1129
        %v1132 = vmul.f32 %v1121, %v1130
        %v1133 = vmul.f32 %v1123, %v1131
        %v1134 = vpack.c.bf16 %v1132, %v1132
        %v1135 = vpack.c.bf16 %v1133, %v1133
        %v1137 = vsel %vm863, %v1134, 0
        %v1140 = vsel %vm929, %v1072, 0
        %1142 = vmatpush.bf16.msra.mxu0 0
        %1143 = vmatpush.bf16.msra.mxu0 0
        %1144 = vmatpush.bf16.msra.mxu0 0
        %1145 = vmatpush.bf16.msra.mxu0 0
        %1146 = vmatpush.bf16.msra.mxu0 0
        %1147 = vmatpush.bf16.msra.mxu0 0
        %1148 = vmatpush.bf16.msra.mxu0 0
        %1149 = vmatpush.bf16.msra.mxu0 %v1140
        %1150 = vmatmul.bf16.gmra.mxu0 %v1137
        %v1151 = vpop.f32.mrf.mxu0
        %v1152 = vadd.f32 0.0, %v1151
        %v1153 = vpop.f32.mrf.mxu0
        %1154 = vdwg.mxu0
        %v1156 = vsel %vm863, %v1135, 0
        %v1159 = vsel %vm929, %v1073, 0
        %1161 = vmatpush.bf16.msra.mxu0 0
        %1162 = vmatpush.bf16.msra.mxu0 0
        %1163 = vmatpush.bf16.msra.mxu0 0
        %1164 = vmatpush.bf16.msra.mxu0 0
        %1165 = vmatpush.bf16.msra.mxu0 0
        %1166 = vmatpush.bf16.msra.mxu0 0
        %1167 = vmatpush.bf16.msra.mxu0 0
        %1168 = vmatpush.bf16.msra.mxu0 %v1159
        %1169 = vmatmul.bf16.gmra.mxu0 %v1156
        %v1170 = vpop.f32.mrf.mxu0
        %v1171 = vadd.f32 0.0, %v1170
        %v1172 = vpop.f32.mrf.mxu0
        %1173 = vdwg.mxu0
        %v1174 = vpack.c.bf16 %v1171, %v1152
        %s1175 = scalar_lea.vmem %s714, 4
        %v1176 = vld [vmem:[%s1175] sm:$0xf]
        %v1178 = vsel %vm863, %v1174, 0
        %v1181 = vsel %vm929, %v1176, 0
        %1183 = vmatpush.bf16.msra.mxu0 0
        %1184 = vmatpush.bf16.msra.mxu0 0
        %1185 = vmatpush.bf16.msra.mxu0 0
        %1186 = vmatpush.bf16.msra.mxu0 0
        %1187 = vmatpush.bf16.msra.mxu0 0
        %1188 = vmatpush.bf16.msra.mxu0 0
        %1189 = vmatpush.bf16.msra.mxu0 0
        %1190 = vmatpush.bf16.msra.mxu0 %v1181
        %1191 = vmatmul.bf16.gmra.mxu0 %v1178
        %v1192 = vpop.f32.mrf.mxu0
        %v1193 = vadd.f32 0.0, %v1192
        %v1194 = vpop.f32.mrf.mxu0
        %v1195 = vadd.f32 0.0, %v1194
        %1196 = vdwg.mxu0
        %v1198 = vsel %vm863, %v965, 0
        %v1201 = vsel %vm929, %v966, 0
        %1203 = vmatpush.bf16.msra.mxu0 0
        %1204 = vmatpush.bf16.msra.mxu0 0
        %1205 = vmatpush.bf16.msra.mxu0 0
        %1206 = vmatpush.bf16.msra.mxu0 0
        %1207 = vmatpush.bf16.msra.mxu0 0
        %1208 = vmatpush.bf16.msra.mxu0 0
        %1209 = vmatpush.bf16.msra.mxu0 0
        %1210 = vmatpush.bf16.msra.mxu0 %v1201
        %1211 = vmatmul.bf16.gmra.mxu0 %v1198
        %v1212 = vpop.f32.mrf.mxu0
        %v1213 = vadd.f32 %v1193, %v1212
        %v1214 = vpop.f32.mrf.mxu0
        %v1215 = vadd.f32 %v1195, %v1214
        %1216 = vdwg.mxu0
        %s1217 = scalar_lea.vmem %s687, 32
        %v1218 = vld [vmem:[%s1217] sm:$0xf]
        %v1219 = vld [vmem:[%s1217 + $0x4] sm:$0xf]
        %v1220 = vld [vmem:[%s1217 + $0x8] sm:$0xf]
        %v1221 = vld [vmem:[%s1217 + $0xc] sm:$0xf]
        %v1222 = vld [vmem:[%s691 + $0x2] sm:$0x1]
        %v1223 = vperm.slane %v1222, 0
        %v1228 = vunpack.c.l.b16 %v1218
        %v1229 = vunpack.c.l.b16 %v1219
        %v1230 = vunpack.c.l.b16 %v1220
        %v1231 = vunpack.c.l.b16 %v1221
        %v1232 = vpack.c.b16 %v1229, %v1228
        %v1233 = vpack.c.b16 %v1231, %v1230
        %1236 = vmatpush.bf16.msra.mxu0 0
        %1237 = vmatpush.bf16.msra.mxu0 0
        %1238 = vmatpush.bf16.msra.mxu0 0
        %1239 = vmatpush.bf16.msra.mxu0 0
        %1240 = vmatpush.bf16.msra.mxu0 0
        %1241 = vmatpush.bf16.msra.mxu0 0
        %1242 = vmatpush.bf16.msra.mxu0 %v1233
        %1243 = vmatpush.bf16.msra.mxu0 %v1232
        %1244 = vmatmul.bf16.gmra.mxu0 %v775
        %v1245 = vpop.f32.mrf.mxu0
        %v1246 = vadd.f32 %v1223, %v1245
        %v1247 = vpop.f32.mrf.mxu0
        %v1248 = vadd.f32 %v1223, %v1247
        %1249 = vdwg.mxu0
        %s1250 = scalar_lea.vmem %s696, 32
        %v1251 = vld [vmem:[%s1250] sm:$0xf]
        %v1252 = vld [vmem:[%s1250 + $0x4] sm:$0xf]
        %v1253 = vld [vmem:[%s1250 + $0x8] sm:$0xf]
        %v1254 = vld [vmem:[%s1250 + $0xc] sm:$0xf]
        %v1255 = vld [vmem:[%s700 + $0x2] sm:$0x1]
        %v1256 = vperm.slane %v1255, 0
        %v1261 = vunpack.c.l.b16 %v1251
        %v1262 = vunpack.c.l.b16 %v1252
        %v1263 = vunpack.c.l.b16 %v1253
        %v1264 = vunpack.c.l.b16 %v1254
        %v1265 = vpack.c.b16 %v1262, %v1261
        %v1266 = vpack.c.b16 %v1264, %v1263
        %1269 = vmatpush.bf16.msra.mxu0 0
        %1270 = vmatpush.bf16.msra.mxu0 0
        %1271 = vmatpush.bf16.msra.mxu0 0
        %1272 = vmatpush.bf16.msra.mxu0 0
        %1273 = vmatpush.bf16.msra.mxu0 0
        %1274 = vmatpush.bf16.msra.mxu0 0
        %1275 = vmatpush.bf16.msra.mxu0 %v1266
        %1276 = vmatpush.bf16.msra.mxu0 %v1265
        %1277 = vmatmul.bf16.gmra.mxu0 %v775
        %v1278 = vpop.f32.mrf.mxu0
        %v1279 = vadd.f32 %v1256, %v1278
        %v1280 = vpop.f32.mrf.mxu0
        %v1281 = vadd.f32 %v1256, %v1280
        %1282 = vdwg.mxu0
        %s1283 = scalar_lea.vmem %s705, 32
        %v1284 = vld [vmem:[%s1283] sm:$0xf]
        %v1285 = vld [vmem:[%s1283 + $0x4] sm:$0xf]
        %v1286 = vld [vmem:[%s1283 + $0x8] sm:$0xf]
        %v1287 = vld [vmem:[%s1283 + $0xc] sm:$0xf]
        %v1288 = vld [vmem:[%s709 + $0x2] sm:$0x1]
        %v1289 = vperm.slane %v1288, 0
        %v1294 = vunpack.c.l.b16 %v1284
        %v1295 = vunpack.c.l.b16 %v1285
        %v1296 = vunpack.c.l.b16 %v1286
        %v1297 = vunpack.c.l.b16 %v1287
        %v1298 = vpack.c.b16 %v1295, %v1294
        %v1299 = vpack.c.b16 %v1297, %v1296
        %1302 = vmatpush.bf16.msra.mxu0 0
        %1303 = vmatpush.bf16.msra.mxu0 0
        %1304 = vmatpush.bf16.msra.mxu0 0
        %1305 = vmatpush.bf16.msra.mxu0 0
        %1306 = vmatpush.bf16.msra.mxu0 0
        %1307 = vmatpush.bf16.msra.mxu0 0
        %1308 = vmatpush.bf16.msra.mxu0 %v1299
        %1309 = vmatpush.bf16.msra.mxu0 %v1298
        %1310 = vmatmul.bf16.gmra.mxu0 %v775
        %v1311 = vpop.f32.mrf.mxu0
        %v1312 = vadd.f32 %v1289, %v1311
        %v1313 = vpop.f32.mrf.mxu0
        %v1314 = vadd.f32 %v1289, %v1313
        %1315 = vdwg.mxu0
        %v1316 = vmul.f32 %v1246, 0.17677669
        %v1317 = vmul.f32 %v1248, 0.17677669
        %v1318 = vpack.c.bf16 %v1316, %v1316
        %v1319 = vpack.c.bf16 %v1317, %v1317
        %v1320 = vpack.c.bf16 %v1279, %v1279
        %v1321 = vpack.c.bf16 %v1281, %v1281
        %v1322 = vpack.c.bf16 %v1312, %v1312
        %v1323 = vpack.c.bf16 %v1314, %v1314
        %v1325 = vsel %vm863, %v1318, 0
        %v1328 = vsel %vm863, %v1320, 0
        %1330 = vmatpush.bf16.xpose.msra.mxu0 0
        %1331 = vmatpush.bf16.xpose.msra.mxu0 0
        %1332 = vmatpush.bf16.xpose.msra.mxu0 0
        %1333 = vmatpush.bf16.xpose.msra.mxu0 0
        %1334 = vmatpush.bf16.xpose.msra.mxu0 0
        %1335 = vmatpush.bf16.xpose.msra.mxu0 0
        %1336 = vmatpush.bf16.xpose.msra.mxu0 0
        %1337 = vmatpush.bf16.xpose.msra.mxu0 %v1328
        %1338 = vmatmul.bf16.gmra.mxu0 %v1325
        %v1339 = vpop.f32.mrf.mxu0
        %v1340 = vadd.f32 0.0, %v1339
        %v1341 = vpop.f32.mrf.mxu0
        %1342 = vdwg.mxu0
        %v1344 = vsel %vm863, %v1319, 0
        %v1347 = vsel %vm863, %v1321, 0
        %1349 = vmatpush.bf16.xpose.msra.mxu0 0
        %1350 = vmatpush.bf16.xpose.msra.mxu0 0
        %1351 = vmatpush.bf16.xpose.msra.mxu0 0
        %1352 = vmatpush.bf16.xpose.msra.mxu0 0
        %1353 = vmatpush.bf16.xpose.msra.mxu0 0
        %1354 = vmatpush.bf16.xpose.msra.mxu0 0
        %1355 = vmatpush.bf16.xpose.msra.mxu0 0
        %1356 = vmatpush.bf16.xpose.msra.mxu0 %v1347
        %1357 = vmatmul.bf16.gmra.mxu0 %v1344
        %v1358 = vpop.f32.mrf.mxu0
        %v1359 = vadd.f32 0.0, %v1358
        %v1360 = vpop.f32.mrf.mxu0
        %1361 = vdwg.mxu0
        %v1362 = vsel %vm863, %v1340, -inf
        %1363 = vmax.xlane.f32.xlu0 %v1362
        %v1364 = vpop.xlane.xlu0 %1363
        %v1365 = vsel %vm863, %v1359, -inf
        %1366 = vmax.xlane.f32.xlu0 %v1365
        %v1367 = vpop.xlane.xlu0 %1366
        %v1368 = vsub.f32 %v1340, %v1364
        %v1369 = vsub.f32 %v1359, %v1367
        %v1370 = vmul.f32 %v1368, 1.442695
        %v1371 = vpow.pop %v1370
        %v1372 = vmul.f32 %v1369, 1.442695
        %v1373 = vpow.pop %v1372
        %v1374 = vsel %vm863, %v1371, 0.0
        %1375 = vadd.xlane.f32.xlu0 %v1374
        %v1376 = vpop.xlane.xlu0 %1375
        %v1377 = vsel %vm863, %v1373, 0.0
        %1378 = vadd.xlane.f32.xlu0 %v1377
        %v1379 = vpop.xlane.xlu0 %1378
        %v1380 = vrcp.pop %v1376
        %v1381 = vrcp.pop %v1379
        %v1382 = vmul.f32 %v1371, %v1380
        %v1383 = vmul.f32 %v1373, %v1381
        %v1384 = vpack.c.bf16 %v1382, %v1382
        %v1385 = vpack.c.bf16 %v1383, %v1383
        %v1387 = vsel %vm863, %v1384, 0
        %v1390 = vsel %vm929, %v1322, 0
        %1392 = vmatpush.bf16.msra.mxu0 0
        %1393 = vmatpush.bf16.msra.mxu0 0
        %1394 = vmatpush.bf16.msra.mxu0 0
        %1395 = vmatpush.bf16.msra.mxu0 0
        %1396 = vmatpush.bf16.msra.mxu0 0
        %1397 = vmatpush.bf16.msra.mxu0 0
        %1398 = vmatpush.bf16.msra.mxu0 0
        %1399 = vmatpush.bf16.msra.mxu0 %v1390
        %1400 = vmatmul.bf16.gmra.mxu0 %v1387
        %v1401 = vpop.f32.mrf.mxu0
        %v1402 = vadd.f32 0.0, %v1401
        %v1403 = vpop.f32.mrf.mxu0
        %1404 = vdwg.mxu0
        %v1406 = vsel %vm863, %v1385, 0
        %v1409 = vsel %vm929, %v1323, 0
        %1411 = vmatpush.bf16.msra.mxu0 0
        %1412 = vmatpush.bf16.msra.mxu0 0
        %1413 = vmatpush.bf16.msra.mxu0 0
        %1414 = vmatpush.bf16.msra.mxu0 0
        %1415 = vmatpush.bf16.msra.mxu0 0
        %1416 = vmatpush.bf16.msra.mxu0 0
        %1417 = vmatpush.bf16.msra.mxu0 0
        %1418 = vmatpush.bf16.msra.mxu0 %v1409
        %1419 = vmatmul.bf16.gmra.mxu0 %v1406
        %v1420 = vpop.f32.mrf.mxu0
        %v1421 = vadd.f32 0.0, %v1420
        %v1422 = vpop.f32.mrf.mxu0
        %1423 = vdwg.mxu0
        %v1424 = vpack.c.bf16 %v1421, %v1402
        %s1425 = scalar_lea.vmem %s714, 8
        %v1426 = vld [vmem:[%s1425] sm:$0xf]
        %v1428 = vsel %vm863, %v1424, 0
        %v1431 = vsel %vm929, %v1426, 0
        %1433 = vmatpush.bf16.msra.mxu0 0
        %1434 = vmatpush.bf16.msra.mxu0 0
        %1435 = vmatpush.bf16.msra.mxu0 0
        %1436 = vmatpush.bf16.msra.mxu0 0
        %1437 = vmatpush.bf16.msra.mxu0 0
        %1438 = vmatpush.bf16.msra.mxu0 0
        %1439 = vmatpush.bf16.msra.mxu0 0
        %1440 = vmatpush.bf16.msra.mxu0 %v1431
        %1441 = vmatmul.bf16.gmra.mxu0 %v1428
        %v1442 = vpop.f32.mrf.mxu0
        %v1443 = vadd.f32 0.0, %v1442
        %v1444 = vpop.f32.mrf.mxu0
        %v1445 = vadd.f32 0.0, %v1444
        %1446 = vdwg.mxu0
        %v1447 = vadd.f32 %v1213, %v1443
        %v1448 = vadd.f32 %v1215, %v1445
        %s1449 = scalar_lea.vmem %s687, 48
        %v1450 = vld [vmem:[%s1449] sm:$0xf]
        %v1451 = vld [vmem:[%s1449 + $0x4] sm:$0xf]
        %v1452 = vld [vmem:[%s1449 + $0x8] sm:$0xf]
        %v1453 = vld [vmem:[%s1449 + $0xc] sm:$0xf]
        %v1454 = vld [vmem:[%s691 + $0x3] sm:$0x1]
        %v1455 = vperm.slane %v1454, 0
        %v1460 = vunpack.c.l.b16 %v1450
        %v1461 = vunpack.c.l.b16 %v1451
        %v1462 = vunpack.c.l.b16 %v1452
        %v1463 = vunpack.c.l.b16 %v1453
        %v1464 = vpack.c.b16 %v1461, %v1460
        %v1465 = vpack.c.b16 %v1463, %v1462
        %1468 = vmatpush.bf16.msra.mxu0 0
        %1469 = vmatpush.bf16.msra.mxu0 0
        %1470 = vmatpush.bf16.msra.mxu0 0
        %1471 = vmatpush.bf16.msra.mxu0 0
        %1472 = vmatpush.bf16.msra.mxu0 0
        %1473 = vmatpush.bf16.msra.mxu0 0
        %1474 = vmatpush.bf16.msra.mxu0 %v1465
        %1475 = vmatpush.bf16.msra.mxu0 %v1464
        %1476 = vmatmul.bf16.gmra.mxu0 %v775
        %v1477 = vpop.f32.mrf.mxu0
        %v1478 = vadd.f32 %v1455, %v1477
        %v1479 = vpop.f32.mrf.mxu0
        %v1480 = vadd.f32 %v1455, %v1479
        %1481 = vdwg.mxu0
        %s1482 = scalar_lea.vmem %s696, 48
        %v1483 = vld [vmem:[%s1482] sm:$0xf]
        %v1484 = vld [vmem:[%s1482 + $0x4] sm:$0xf]
        %v1485 = vld [vmem:[%s1482 + $0x8] sm:$0xf]
        %v1486 = vld [vmem:[%s1482 + $0xc] sm:$0xf]
        %v1487 = vld [vmem:[%s700 + $0x3] sm:$0x1]
        %v1488 = vperm.slane %v1487, 0
        %v1493 = vunpack.c.l.b16 %v1483
        %v1494 = vunpack.c.l.b16 %v1484
        %v1495 = vunpack.c.l.b16 %v1485
        %v1496 = vunpack.c.l.b16 %v1486
        %v1497 = vpack.c.b16 %v1494, %v1493
        %v1498 = vpack.c.b16 %v1496, %v1495
        %1501 = vmatpush.bf16.msra.mxu0 0
        %1502 = vmatpush.bf16.msra.mxu0 0
        %1503 = vmatpush.bf16.msra.mxu0 0
        %1504 = vmatpush.bf16.msra.mxu0 0
        %1505 = vmatpush.bf16.msra.mxu0 0
        %1506 = vmatpush.bf16.msra.mxu0 0
        %1507 = vmatpush.bf16.msra.mxu0 %v1498
        %1508 = vmatpush.bf16.msra.mxu0 %v1497
        %1509 = vmatmul.bf16.gmra.mxu0 %v775
        %v1510 = vpop.f32.mrf.mxu0
        %v1511 = vadd.f32 %v1488, %v1510
        %v1512 = vpop.f32.mrf.mxu0
        %v1513 = vadd.f32 %v1488, %v1512
        %1514 = vdwg.mxu0
        %s1515 = scalar_lea.vmem %s705, 48
        %v1516 = vld [vmem:[%s1515] sm:$0xf]
        %v1517 = vld [vmem:[%s1515 + $0x4] sm:$0xf]
        %v1518 = vld [vmem:[%s1515 + $0x8] sm:$0xf]
        %v1519 = vld [vmem:[%s1515 + $0xc] sm:$0xf]
        %v1520 = vld [vmem:[%s709 + $0x3] sm:$0x1]
        %v1521 = vperm.slane %v1520, 0
        %v1526 = vunpack.c.l.b16 %v1516
        %v1527 = vunpack.c.l.b16 %v1517
        %v1528 = vunpack.c.l.b16 %v1518
        %v1529 = vunpack.c.l.b16 %v1519
        %v1530 = vpack.c.b16 %v1527, %v1526
        %v1531 = vpack.c.b16 %v1529, %v1528
        %1534 = vmatpush.bf16.msra.mxu0 0
        %1535 = vmatpush.bf16.msra.mxu0 0
        %1536 = vmatpush.bf16.msra.mxu0 0
        %1537 = vmatpush.bf16.msra.mxu0 0
        %1538 = vmatpush.bf16.msra.mxu0 0
        %1539 = vmatpush.bf16.msra.mxu0 0
        %1540 = vmatpush.bf16.msra.mxu0 %v1531
        %1541 = vmatpush.bf16.msra.mxu0 %v1530
        %1542 = vmatmul.bf16.gmra.mxu0 %v775
        %v1543 = vpop.f32.mrf.mxu0
        %v1544 = vadd.f32 %v1521, %v1543
        %v1545 = vpop.f32.mrf.mxu0
        %v1546 = vadd.f32 %v1521, %v1545
        %1547 = vdwg.mxu0
        %v1548 = vmul.f32 %v1478, 0.17677669
        %v1549 = vmul.f32 %v1480, 0.17677669
        %v1550 = vpack.c.bf16 %v1548, %v1548
        %v1551 = vpack.c.bf16 %v1549, %v1549
        %v1552 = vpack.c.bf16 %v1511, %v1511
        %v1553 = vpack.c.bf16 %v1513, %v1513
        %v1554 = vpack.c.bf16 %v1544, %v1544
        %v1555 = vpack.c.bf16 %v1546, %v1546
        %v1557 = vsel %vm863, %v1550, 0
        %v1560 = vsel %vm863, %v1552, 0
        %1562 = vmatpush.bf16.xpose.msra.mxu0 0
        %1563 = vmatpush.bf16.xpose.msra.mxu0 0
        %1564 = vmatpush.bf16.xpose.msra.mxu0 0
        %1565 = vmatpush.bf16.xpose.msra.mxu0 0
        %1566 = vmatpush.bf16.xpose.msra.mxu0 0
        %1567 = vmatpush.bf16.xpose.msra.mxu0 0
        %1568 = vmatpush.bf16.xpose.msra.mxu0 0
        %1569 = vmatpush.bf16.xpose.msra.mxu0 %v1560
        %1570 = vmatmul.bf16.gmra.mxu0 %v1557
        %v1571 = vpop.f32.mrf.mxu0
        %v1572 = vadd.f32 0.0, %v1571
        %v1573 = vpop.f32.mrf.mxu0
        %1574 = vdwg.mxu0
        %v1576 = vsel %vm863, %v1551, 0
        %v1579 = vsel %vm863, %v1553, 0
        %1581 = vmatpush.bf16.xpose.msra.mxu0 0
        %1582 = vmatpush.bf16.xpose.msra.mxu0 0
        %1583 = vmatpush.bf16.xpose.msra.mxu0 0
        %1584 = vmatpush.bf16.xpose.msra.mxu0 0
        %1585 = vmatpush.bf16.xpose.msra.mxu0 0
        %1586 = vmatpush.bf16.xpose.msra.mxu0 0
        %1587 = vmatpush.bf16.xpose.msra.mxu0 0
        %1588 = vmatpush.bf16.xpose.msra.mxu0 %v1579
        %1589 = vmatmul.bf16.gmra.mxu0 %v1576
        %v1590 = vpop.f32.mrf.mxu0
        %v1591 = vadd.f32 0.0, %v1590
        %v1592 = vpop.f32.mrf.mxu0
        %1593 = vdwg.mxu0
        %v1594 = vsel %vm863, %v1572, -inf
        %1595 = vmax.xlane.f32.xlu0 %v1594
        %v1596 = vpop.xlane.xlu0 %1595
        %v1597 = vsel %vm863, %v1591, -inf
        %1598 = vmax.xlane.f32.xlu0 %v1597
        %v1599 = vpop.xlane.xlu0 %1598
        %v1600 = vsub.f32 %v1572, %v1596
        %v1601 = vsub.f32 %v1591, %v1599
        %v1602 = vmul.f32 %v1600, 1.442695
        %v1603 = vpow.pop %v1602
        %v1604 = vmul.f32 %v1601, 1.442695
        %v1605 = vpow.pop %v1604
        %v1606 = vsel %vm863, %v1603, 0.0
        %1607 = vadd.xlane.f32.xlu0 %v1606
        %v1608 = vpop.xlane.xlu0 %1607
        %v1609 = vsel %vm863, %v1605, 0.0
        %1610 = vadd.xlane.f32.xlu0 %v1609
        %v1611 = vpop.xlane.xlu0 %1610
        %v1612 = vrcp.pop %v1608
        %v1613 = vrcp.pop %v1611
        %v1614 = vmul.f32 %v1603, %v1612
        %v1615 = vmul.f32 %v1605, %v1613
        %v1616 = vpack.c.bf16 %v1614, %v1614
        %v1617 = vpack.c.bf16 %v1615, %v1615
        %v1619 = vsel %vm863, %v1616, 0
        %v1622 = vsel %vm929, %v1554, 0
        %1624 = vmatpush.bf16.msra.mxu0 0
        %1625 = vmatpush.bf16.msra.mxu0 0
        %1626 = vmatpush.bf16.msra.mxu0 0
        %1627 = vmatpush.bf16.msra.mxu0 0
        %1628 = vmatpush.bf16.msra.mxu0 0
        %1629 = vmatpush.bf16.msra.mxu0 0
        %1630 = vmatpush.bf16.msra.mxu0 0
        %1631 = vmatpush.bf16.msra.mxu0 %v1622
        %1632 = vmatmul.bf16.gmra.mxu0 %v1619
        %v1633 = vpop.f32.mrf.mxu0
        %v1634 = vadd.f32 0.0, %v1633
        %v1635 = vpop.f32.mrf.mxu0
        %1636 = vdwg.mxu0
        %v1638 = vsel %vm863, %v1617, 0
        %v1641 = vsel %vm929, %v1555, 0
        %1643 = vmatpush.bf16.msra.mxu0 0
        %1644 = vmatpush.bf16.msra.mxu0 0
        %1645 = vmatpush.bf16.msra.mxu0 0
        %1646 = vmatpush.bf16.msra.mxu0 0
        %1647 = vmatpush.bf16.msra.mxu0 0
        %1648 = vmatpush.bf16.msra.mxu0 0
        %1649 = vmatpush.bf16.msra.mxu0 0
        %1650 = vmatpush.bf16.msra.mxu0 %v1641
        %1651 = vmatmul.bf16.gmra.mxu0 %v1638
        %v1652 = vpop.f32.mrf.mxu0
        %v1653 = vadd.f32 0.0, %v1652
        %v1654 = vpop.f32.mrf.mxu0
        %1655 = vdwg.mxu0
        %v1656 = vpack.c.bf16 %v1653, %v1634
        %s1657 = scalar_lea.vmem %s714, 12
        %v1658 = vld [vmem:[%s1657] sm:$0xf]
        %v1660 = vsel %vm863, %v1656, 0
        %v1663 = vsel %vm929, %v1658, 0
        %1665 = vmatpush.bf16.msra.mxu0 0
        %1666 = vmatpush.bf16.msra.mxu0 0
        %1667 = vmatpush.bf16.msra.mxu0 0
        %1668 = vmatpush.bf16.msra.mxu0 0
        %1669 = vmatpush.bf16.msra.mxu0 0
        %1670 = vmatpush.bf16.msra.mxu0 0
        %1671 = vmatpush.bf16.msra.mxu0 0
        %1672 = vmatpush.bf16.msra.mxu0 %v1663
        %1673 = vmatmul.bf16.gmra.mxu0 %v1660
        %v1674 = vpop.f32.mrf.mxu0
        %v1675 = vadd.f32 0.0, %v1674
        %v1676 = vpop.f32.mrf.mxu0
        %v1677 = vadd.f32 0.0, %v1676
        %1678 = vdwg.mxu0
        %v1679 = vadd.f32 %v1447, %v1675
        %v1680 = vadd.f32 %v1448, %v1677
        %v1681 = vld [vmem:[%s717] sm:$0x1]
        %v1683 = vperm.slane %v1681, 0
        %v1685 = vadd.f32 %v1679, %v1683
        %v1686 = vadd.f32 %v1680, %v1683
        %1687 = vst.msk [vmem:[%s680] sm:$0xff] %vm863, %v922
        %1688 = vst.msk [vmem:[%s680 + $0x8] sm:$0xff] %vm863, %v1132
        %1689 = vst.msk [vmem:[%s680 + $0x10] sm:$0xff] %vm863, %v1382
        %1690 = vst.msk [vmem:[%s680 + $0x18] sm:$0xff] %vm863, %v1614
        %1691 = vst.msk [vmem:[%s680 + $0x20] sm:$0xff] %vm863, %v923
        %1692 = vst.msk [vmem:[%s680 + $0x28] sm:$0xff] %vm863, %v1133
        %1693 = vst.msk [vmem:[%s680 + $0x30] sm:$0xff] %vm863, %v1383
        %1694 = vst.msk [vmem:[%s680 + $0x38] sm:$0xff] %vm863, %v1615
        %v1695 = vadd.f32 %v750, %v1685
        %v1696 = vadd.f32 %v751, %v1686
        %v1697 = vsel %vm773, %v1695, 0.0
        %1698 = vadd.xlane.f32.xlu0 %v1697
        %v1699 = vpop.xlane.xlu0 %1698
        %v1700 = vsel %vm773, %v1696, 0.0
        %1701 = vadd.xlane.f32.xlu0 %v1700
        %v1702 = vpop.xlane.xlu0 %1701
        %v1703 = vrcp.pop 32.0
        %v1704 = vmul.f32 32.0, %v1703
        %v1705 = vsub.f32 1.0, %v1704
        %v1706 = vmul.f32 %v1703, %v1705
        %v1707 = vadd.f32 %v1703, %v1706
        %vm1708 = vweird.f32 %v1703
        %v1709 = vsel %vm1708, %v1703, %v1707
        %v1710 = vmul.f32 %v1699, %v1709
        %v1711 = vmul.f32 %v1702, %v1709
        %v1712 = vsub.f32 %v1695, %v1710
        %v1713 = vsub.f32 %v1696, %v1711
        %v1714 = vmul.f32 %v1712, %v1712
        %v1715 = vmul.f32 %v1713, %v1713
        %v1716 = vsel %vm773, %v1714, 0.0
        %1717 = vadd.xlane.f32.xlu0 %v1716
        %v1718 = vpop.xlane.xlu0 %1717
        %v1719 = vsel %vm773, %v1715, 0.0
        %1720 = vadd.xlane.f32.xlu0 %v1719
        %v1721 = vpop.xlane.xlu0 %1720
        %v1722 = vmul.f32 %v1718, %v1709
        %v1723 = vmul.f32 %v1721, %v1709
        %v1724 = vadd.f32 %v1722, 1e-06
        %v1725 = vadd.f32 %v1723, 1e-06
        %v1726 = vrsqrt.pop %v1724
        %v1727 = vmul.f32 %v1726, %v1724
        %v1728 = vmul.f32 %v1727, %v1726
        %v1729 = vmul.f32 0.5, %v1728
        %v1730 = vsub.f32 1.5, %v1729
        %v1731 = vmul.f32 %v1726, %v1730
        %vm1732 = vweird.f32 %v1724
        %vm1733 = vweird.f32 %v1726
        %vm1734 = vmor %vm1732, %vm1733
        %v1735 = vsel %vm1734, %v1726, %v1731
        %v1736 = vrsqrt.pop %v1725
        %v1737 = vmul.f32 %v1736, %v1725
        %v1738 = vmul.f32 %v1737, %v1736
        %v1739 = vmul.f32 0.5, %v1738
        %v1740 = vsub.f32 1.5, %v1739
        %v1741 = vmul.f32 %v1736, %v1740
        %vm1742 = vweird.f32 %v1725
        %vm1743 = vweird.f32 %v1736
        %vm1744 = vmor %vm1742, %vm1743
        %v1745 = vsel %vm1744, %v1736, %v1741
        %v1746 = vmul.f32 %v1712, %v1735
        %v1747 = vmul.f32 %v1713, %v1745
        %v1749 = vperm.slane %v753, 0
        %v1751 = vmul.f32 %v1746, %v1749
        %v1752 = vmul.f32 %v1747, %v1749
        %v1754 = vperm.slane %v754, 0
        %v1756 = vadd.f32 %v1751, %v1754
        %v1757 = vadd.f32 %v1752, %v1754
        %v1758 = vpack.c.bf16 %v1757, %v1756
        %v1759 = vld [vmem:[%s722] sm:$0xf]
        %v1760 = vld [vmem:[%s722 + $0x4] sm:$0xf]
        %v1761 = vld [vmem:[%s722 + $0x8] sm:$0xf]
        %v1762 = vld [vmem:[%s722 + $0xc] sm:$0xf]
        %v1763 = vld [vmem:[%s725] sm:$0x1]
        %v1765 = vperm.slane %v1763, 0
        %v1771 = vunpack.c.l.b16 %v1759
        %v1772 = vunpack.c.l.b16 %v1760
        %v1773 = vunpack.c.l.b16 %v1761
        %v1774 = vunpack.c.l.b16 %v1762
        %v1775 = vpack.c.b16 %v1772, %v1771
        %v1776 = vpack.c.b16 %v1774, %v1773
        %v1780 = vsel %vm773, %v1758, 0
        %1782 = vmatpush.bf16.msra.mxu0 0
        %1783 = vmatpush.bf16.msra.mxu0 0
        %1784 = vmatpush.bf16.msra.mxu0 0
        %1785 = vmatpush.bf16.msra.mxu0 0
        %1786 = vmatpush.bf16.msra.mxu0 0
        %1787 = vmatpush.bf16.msra.mxu0 0
        %1788 = vmatpush.bf16.msra.mxu0 %v1776
        %1789 = vmatpush.bf16.msra.mxu0 %v1775
        %1790 = vmatmul.bf16.gmra.mxu0 %v1780
        %v1791 = vpop.f32.mrf.mxu0
        %v1792 = vadd.f32 %v1765, %v1791
        %v1793 = vpop.f32.mrf.mxu0
        %v1794 = vadd.f32 %v1765, %v1793
        %1795 = vdwg.mxu0
        %v1796 = vmax.f32 %v1792, 0.0
        %v1797 = vmax.f32 %v1794, 0.0
        %v1798 = vpack.c.bf16 %v1797, %v1796
        %v1799 = vld [vmem:[%s730] sm:$0xf]
        %v1800 = vld [vmem:[%s730 + $0x4] sm:$0xf]
        %v1801 = vld [vmem:[%s730 + $0x8] sm:$0xf]
        %v1802 = vld [vmem:[%s730 + $0xc] sm:$0xf]
        %v1803 = vld [vmem:[%s730 + $0x10] sm:$0xf]
        %v1804 = vld [vmem:[%s730 + $0x14] sm:$0xf]
        %v1805 = vld [vmem:[%s730 + $0x18] sm:$0xf]
        %v1806 = vld [vmem:[%s730 + $0x1c] sm:$0xf]
        %v1807 = vld [vmem:[%s730 + $0x20] sm:$0xf]
        %v1808 = vld [vmem:[%s730 + $0x24] sm:$0xf]
        %v1809 = vld [vmem:[%s730 + $0x28] sm:$0xf]
        %v1810 = vld [vmem:[%s730 + $0x2c] sm:$0xf]
        %v1811 = vld [vmem:[%s730 + $0x30] sm:$0xf]
        %v1812 = vld [vmem:[%s730 + $0x34] sm:$0xf]
        %v1813 = vld [vmem:[%s730 + $0x38] sm:$0xf]
        %v1814 = vld [vmem:[%s730 + $0x3c] sm:$0xf]
        %v1815 = vld [vmem:[%s733] sm:$0x1]
        %v1817 = vperm.slane %v1815, 0
        %v1835 = vunpack.c.l.b16 %v1799
        %v1836 = vunpack.c.l.b16 %v1800
        %v1837 = vunpack.c.l.b16 %v1801
        %v1838 = vunpack.c.l.b16 %v1802
        %v1839 = vunpack.c.l.b16 %v1803
        %v1840 = vunpack.c.l.b16 %v1804
        %v1841 = vunpack.c.l.b16 %v1805
        %v1842 = vunpack.c.l.b16 %v1806
        %v1843 = vunpack.c.l.b16 %v1807
        %v1844 = vunpack.c.l.b16 %v1808
        %v1845 = vunpack.c.l.b16 %v1809
        %v1846 = vunpack.c.l.b16 %v1810
        %v1847 = vunpack.c.l.b16 %v1811
        %v1848 = vunpack.c.l.b16 %v1812
        %v1849 = vunpack.c.l.b16 %v1813
        %v1850 = vunpack.c.l.b16 %v1814
        %v1851 = vpack.c.b16 %v1836, %v1835
        %v1852 = vpack.c.b16 %v1838, %v1837
        %v1853 = vpack.c.b16 %v1840, %v1839
        %v1854 = vpack.c.b16 %v1842, %v1841
        %v1855 = vpack.c.b16 %v1844, %v1843
        %v1856 = vpack.c.b16 %v1846, %v1845
        %v1857 = vpack.c.b16 %v1848, %v1847
        %v1858 = vpack.c.b16 %v1850, %v1849
        %1867 = vmatpush.bf16.msra.mxu0 %v1858
        %1868 = vmatpush.bf16.msra.mxu0 %v1857
        %1869 = vmatpush.bf16.msra.mxu0 %v1856
        %1870 = vmatpush.bf16.msra.mxu0 %v1855
        %1871 = vmatpush.bf16.msra.mxu0 %v1854
        %1872 = vmatpush.bf16.msra.mxu0 %v1853
        %1873 = vmatpush.bf16.msra.mxu0 %v1852
        %1874 = vmatpush.bf16.msra.mxu0 %v1851
        %1875 = vmatmul.bf16.gmra.mxu0 %v1798
        %v1876 = vpop.f32.mrf.mxu0
        %v1877 = vadd.f32 %v1817, %v1876
        %v1878 = vpop.f32.mrf.mxu0
        %v1879 = vadd.f32 %v1817, %v1878
        %1880 = vdwg.mxu0
        %v1881 = vadd.f32 %v1756, %v1877
        %v1882 = vadd.f32 %v1757, %v1879
        %v1883 = vsel %vm773, %v1881, 0.0
        %1884 = vadd.xlane.f32.xlu0 %v1883
        %v1885 = vpop.xlane.xlu0 %1884
        %v1886 = vsel %vm773, %v1882, 0.0
        %1887 = vadd.xlane.f32.xlu0 %v1886
        %v1888 = vpop.xlane.xlu0 %1887
        %v1889 = vmul.f32 %v1885, %v1709
        %v1890 = vmul.f32 %v1888, %v1709
        %v1891 = vsub.f32 %v1881, %v1889
        %v1892 = vsub.f32 %v1882, %v1890
        %v1893 = vmul.f32 %v1891, %v1891
        %v1894 = vmul.f32 %v1892, %v1892
        %v1895 = vsel %vm773, %v1893, 0.0
        %1896 = vadd.xlane.f32.xlu0 %v1895
        %v1897 = vpop.xlane.xlu0 %1896
        %v1898 = vsel %vm773, %v1894, 0.0
        %1899 = vadd.xlane.f32.xlu0 %v1898
        %v1900 = vpop.xlane.xlu0 %1899
        %v1901 = vmul.f32 %v1897, %v1709
        %v1902 = vmul.f32 %v1900, %v1709
        %v1903 = vadd.f32 %v1901, 1e-06
        %v1904 = vadd.f32 %v1902, 1e-06
        %v1905 = vrsqrt.pop %v1903
        %v1906 = vmul.f32 %v1905, %v1903
        %v1907 = vmul.f32 %v1906, %v1905
        %v1908 = vmul.f32 0.5, %v1907
        %v1909 = vsub.f32 1.5, %v1908
        %v1910 = vmul.f32 %v1905, %v1909
        %vm1911 = vweird.f32 %v1903
        %vm1912 = vweird.f32 %v1905
        %vm1913 = vmor %vm1911, %vm1912
        %v1914 = vsel %vm1913, %v1905, %v1910
        %v1915 = vrsqrt.pop %v1904
        %v1916 = vmul.f32 %v1915, %v1904
        %v1917 = vmul.f32 %v1916, %v1915
        %v1918 = vmul.f32 0.5, %v1917
        %v1919 = vsub.f32 1.5, %v1918
        %v1920 = vmul.f32 %v1915, %v1919
        %vm1921 = vweird.f32 %v1904
        %vm1922 = vweird.f32 %v1915
        %vm1923 = vmor %vm1921, %vm1922
        %v1924 = vsel %vm1923, %v1915, %v1920
        %v1925 = vmul.f32 %v1891, %v1914
        %v1926 = vmul.f32 %v1892, %v1924
        %v1927 = vmul.f32 %v1925, %v1749
        %v1928 = vmul.f32 %v1926, %v1749
        %v1929 = vadd.f32 %v1927, %v1754
        %v1930 = vadd.f32 %v1928, %v1754
        %1931 = vst.msk [vmem:[#allocation2] sm:$0xff] %vm773, %v1929
        %1932 = vst.msk [vmem:[#allocation2 + $0x8] sm:$0xff] %vm773, %v1930
        %p1933 = scmp.eq.s32.totalorder %s32, 1
        // Predicated region
        $region85: #{tpu_custom_call.1} parent=79 // pred_check
          %p1934 = pneg %p1933
        $region86: #{tpu_custom_call.1} parent=79 // pred_check_branch
          %1936 = sbr.rel (%p1934) target = $region88
        $region87: #{tpu_custom_call.1} parent=79 // pred_region
          %1937 = vst.msk [vmem:[#allocation5] sm:$0xff] %vm773, %v1929
          %1938 = vst.msk [vmem:[#allocation5 + $0x8] sm:$0xff] %vm773, %v1930
        $region88: #{tpu_custom_call.1} parent=79 // pred_fallthru
          _
        %s1939 = sand.u32 %s425, 1
        %s1940 = scalar_lea.sflag [#allocation4], %s1939
        %s1941 = sand.u32 %s425, 1
        %s1942 = smul.addr %s1941, 64
        %s1943 = scalar_lea.vmem [#allocation3], %s1942
        // Predicated region
        $region89: #{tpu_custom_call.1} parent=79 // pred_check
          %p1944 = pneg %p435
        $region90: #{tpu_custom_call.1} parent=79 // pred_check_branch
          %1946 = sbr.rel (%p1944) target = $region92
        $region91: #{tpu_custom_call.1} parent=79 // pred_region
          %1948 = vsyncadd %s1940, 0
          %s1949 = smul.addr %s32, 8
          %s1950 = smul.addr %s1949, 8
          %s1951 = scalar_lea.hbm %s15, %s1950
          %s1952 = sshll.u32 %s1943, 4
          %s1953 = int_to_ptr.vmem [resolvable:$true] %s1952
          %s1954 = sshll.u32 %s1951, 4
          %s1955 = int_to_ptr.hbm [resolvable:$true] %s1954
          %1960 = dma.vmem_to_hbm [thread:$0]  %s1953, 1024, %s1955, %s1940, 128, 128, 8
        $region92: #{tpu_custom_call.1} parent=79 // pred_fallthru
          _
        // Predicated region
        $region93: #{tpu_custom_call.1} parent=79 // pred_check
          %p1961 = pneg %p456
        $region94: #{tpu_custom_call.1} parent=79 // pred_check_branch
          %1963 = sbr.rel (%p1961) target = $region96
        $region95: #{tpu_custom_call.1} parent=79 // pred_region
          %1965 = vsyncadd [#allocation6], 0
          %s1966 = sshll.u32 [#allocation5], 4
          %s1967 = int_to_ptr.vmem [resolvable:$true] %s1966
          %s1968 = sshll.u32 %s16, 4
          %s1969 = int_to_ptr.hbm [resolvable:$true] %s1968
          %1974 = dma.vmem_to_hbm [thread:$0]  %s1967, 256, %s1969, [#allocation6], 128, 128, 8
        $region96: #{tpu_custom_call.1} parent=79 // pred_fallthru
          _
        // Predicated region
        $region97: #{tpu_custom_call.1} parent=79 // pred_check
          %p1975 = pneg %p456
        $region98: #{tpu_custom_call.1} parent=79 // pred_check_branch
          %1977 = sbr.rel (%p1975) target = $region100
        $region99: #{tpu_custom_call.1} parent=79 // pred_region
          %1979 = dma.done [#allocation6], 256
        $region100: #{tpu_custom_call.1} parent=79 // pred_fallthru
          _
      $region80: #{tpu_custom_call.1} parent=5 // pred_fallthru
        _
      %p1980 = scmp.le.s32.totalorder 2, %s27
      // Predicated region
      $region101: #{tpu_custom_call.1} parent=5 // pred_check
        %p1981 = pneg %p1980
      $region102: #{tpu_custom_call.1} parent=5 // pred_check_branch
        %1983 = sbr.rel (%p1981) target = $region104
      $region103: #{tpu_custom_call.1} parent=5 // pred_region
        %s1984 = ssub.s32 %s27, 2
        // Predicated region
        $region105: #{tpu_custom_call.1} parent=103 // pred_check
          %p1985 = pneg %p441
        $region106: #{tpu_custom_call.1} parent=103 // pred_check_branch
          %1987 = sbr.rel (%p1985) target = $region108
        $region107: #{tpu_custom_call.1} parent=103 // pred_region
          %s1988 = sand.u32 %s426, 1
          %s1989 = scalar_lea.sflag [#allocation4], %s1988
          %s1990 = sand.u32 %s426, 1
          %s1991 = smul.addr %s1990, 64
          %s1992 = scalar_lea.vmem [#allocation3], %s1991
          %1994 = dma.done %s1989, 1024
        $region108: #{tpu_custom_call.1} parent=103 // pred_fallthru
          _
      $region104: #{tpu_custom_call.1} parent=5 // pred_fallthru
        _
    $region6: #{tpu_custom_call.1} parent=1 // loop_footer
      %s31 = sadd.s32 1, %s27
    $region7: #{tpu_custom_call.1} parent=1 // loop_footer_branch
      %26 = sbr.rel target = $region3
    $region8: #{tpu_custom_call.1} parent=1 // loop_exit
      _
    %1995 = vsyncpa [#allocation4], 1
    %s1996 = scalar_lea.sflag [#allocation4], 1
    %1997 = vsyncpa %s1996, 1
    %1998 = vsyncpa [#allocation6], 1

</llo_original>
